<compile_context>
chip_gen: v6e
topology: v6e:2x2x1
jax: 0.10.0
libtpu: 0.0.40
codegen_flags: <defaults>
</compile_context>

<pallas_src>
import functools

import jax
import jax.numpy as jnp
from jax import lax
from jax.experimental import pallas as pl
from jax.experimental.pallas import tpu as pltpu


def _round_up(x, m):
    return ((x + m - 1) // m) * m


def _test_embedding_reg_kernel(
    ids_ref,    # ((2T+2)*Bp, 1) int32 : [fwd path ids | bwd path ids | word ids | lengths]
    slab_ref,   # (R, W_slab)   bf16   : packed [emb; w_ih; w_hh; biases; w_proj; w_top; b_top]
    out_ref,    # (Bp, W_out)   f32    : [path_out | word_out | 0-pad]
    gin_ref,    # (T*Bp, 8*Hh)  f32    : VMEM scratch for the hoisted input projection
    *,
    T, Bp, E, Hh, V, W_out,
    off_emb, off_wih, off_whh, off_bg, off_wproj, off_bproj, off_wtop, off_btop,
):
    H = 2 * Hh            # per-direction concat width (== dim_hidden)
    G = 8 * Hh            # fused gate lane width
    NP = T * Bp
    NG = 2 * NP + Bp      # rows participating in the embedding gather
    f32 = jnp.float32
    bf16 = jnp.bfloat16

    # ---- static views into the packed bf16 weight slab ----------------------
    emb_w  = slab_ref[off_emb:off_emb + V, 0:E]                # (V, E)
    w_ih_f = slab_ref[off_wih:off_wih + E, 0:G]                # (E, 8Hh)  fwd-input rows
    w_ih_b = slab_ref[off_wih + E:off_wih + 2 * E, 0:G]        # (E, 8Hh)  bwd-input rows
    w_hh   = slab_ref[off_whh:off_whh + H, 0:G]                # (2Hh, 8Hh) block-diagonal
    b_g    = slab_ref[off_bg:off_bg + 1, 0:G].astype(f32)      # (1, 8Hh)
    w_proj = slab_ref[off_wproj:off_wproj + E, 0:H]            # (E, H)
    b_proj = slab_ref[off_bproj:off_bproj + 1, 0:H].astype(f32)
    w_top  = slab_ref[off_wtop:off_wtop + 2 * H, 0:W_out]      # (2H, W_out) block-diag, 0-padded lanes
    b_top  = slab_ref[off_btop:off_btop + 1, 0:W_out].astype(f32)

    ids = ids_ref[0:NG, :]                                     # (NG, 1) int32
    lengths = ids_ref[NG:NG + Bp, :]                           # (Bp, 1) int32

    # ---- fused embedding gather: one-hot @ emb (single MXU pass; V is tiny) --
    # TODO(synk): for production vocab sizes replace the one-hot matmul with a
    # jnp.take on a VMEM-resident table or a manual DMA gather from pl.ANY HBM
    # keyed off SMEM-prefetched indices.
    onehot = (lax.broadcasted_iota(jnp.int32, (NG, V), 1) == ids).astype(bf16)
    gathered = jnp.dot(onehot, emb_w, preferred_element_type=f32)   # (NG, E) f32
    gathered_bf = gathered.astype(bf16)     # exact: one-hot selects bf16 values

    # ---- hoisted input-to-hidden projection for BOTH directions --------------
    # rows s*Bp+b of x_fwd / x_bwd hold emb[path[b, s]] / emb[path[b, T-1-s]]
    x_fwd = gathered_bf[0:NP, :]
    x_bwd = gathered_bf[NP:2 * NP, :]
    gin_ref[...] = (
        jnp.dot(x_fwd, w_ih_f, preferred_element_type=f32)
        + jnp.dot(x_bwd, w_ih_b, preferred_element_type=f32)
        + b_g)                                                  # (T*Bp, 8Hh) f32

    # ---- packed-sequence masks, hoisted off the serial dependence chain ------
    lane_is_fwd = lax.broadcasted_iota(jnp.int32, (Bp, H), 1) < Hh
    masks = [jnp.where(lane_is_fwd, s, T - 1 - s) < lengths for s in range(T)]

    h = jnp.zeros((Bp, H), f32)             # [h_f | h_b]
    c = jnp.zeros((Bp, H), f32)             # [c_f | c_b]

    # ---- fully unrolled recurrence (T small & static) -------------------------
    # per step: 1 bf16 MXU pass, 1 fused sigmoid slab, 2 tanh slabs; pointwise f32
    # TODO(synk): if the Mosaic dump shows w_hh being re-streamed every step,
    # hold it resident via pltpu.matmul_push_rhs / matmul_acc_lhs / matmul_pop.
    for s in range(T):
        gates = gin_ref[s * Bp:(s + 1) * Bp, :] + jnp.dot(
            h.astype(bf16), w_hh, preferred_element_type=f32)   # (Bp, 8Hh) f32
        sig = jax.nn.sigmoid(gates[:, 0:3 * H])   # [i_f i_b f_f f_b o_f o_b]
        g_t = jnp.tanh(gates[:, 3 * H:4 * H])     # [g_f g_b]
        i_g = sig[:, 0:H]
        f_g = sig[:, H:2 * H]
        o_g = sig[:, 2 * H:3 * H]
        c_new = f_g * c + i_g * g_t
        h_new = o_g * jnp.tanh(c_new)
        m = masks[s]                              # fwd lanes gate on t=s, bwd on t=T-1-s
        h = jnp.where(m, h_new, h)
        c = jnp.where(m, c_new, c)

    # ---- fused output heads (one block-diag matmul, lane-dense store) --------
    label = jnp.clip(h, -1.0, 1.0)                              # hardtanh(cat(h_f, h_b))
    we = jnp.clip(gathered[2 * NP:NG, :], -1.0, 1.0)            # hardtanh(embed(word))
    proj = jnp.clip(
        jnp.dot(we.astype(bf16), w_proj, preferred_element_type=f32) + b_proj,
        -1.0, 1.0)
    head_in = jnp.concatenate([label, proj], axis=1).astype(bf16)   # (Bp, 2H)
    out_ref[...] = jnp.dot(head_in, w_top, preferred_element_type=f32) + b_top


def pack_params(params):
    """ONE-TIME weight packing (cache per parameter set).

    Builds a single bf16 slab holding every tensor the kernel needs so the
    per-call forward is just (ids DMA, slab DMA) -> kernel -> (output DMA).
    Returns (slab, cfg) where cfg is a dict of static layout constants.
    """
    f32 = jnp.float32
    emb = params["embedding"]
    V, E = emb.shape
    Hh = params["w_hh_f"].shape[0]
    H = 2 * Hh
    G = 8 * Hh
    D = params["w_tp"].shape[1]
    W_out = _round_up(2 * D, 128)                  # lane-dense unmasked output store
    W_slab = _round_up(max(E, H, G, W_out), 128)

    def r16(x):        # bf16 sublanes pack in pairs -> keep row blocks 16-aligned
        return _round_up(x, 16)

    def split_gates(w):      # PyTorch gate order i, f, g, o
        return (w[..., 0:Hh], w[..., Hh:2 * Hh],
                w[..., 2 * Hh:3 * Hh], w[..., 3 * Hh:4 * Hh])

    # fused gate column layout, chunks of Hh: [i_f i_b f_f f_b o_f o_b g_f g_b]
    iF, fF, gF, oF = split_gates(params["w_ih_f"])
    iB, fB, gB, oB = split_gates(params["w_ih_b"])
    Z = jnp.zeros((E, Hh), f32)
    w_ih_fwd = jnp.concatenate([iF, Z, fF, Z, oF, Z, gF, Z], axis=1)   # x(t) rows
    w_ih_bwd = jnp.concatenate([Z, iB, Z, fB, Z, oB, Z, gB], axis=1)   # x(T-1-t) rows

    iF, fF, gF, oF = split_gates(params["w_hh_f"])
    iB, fB, gB, oB = split_gates(params["w_hh_b"])
    Zh = jnp.zeros((Hh, Hh), f32)
    w_hh_fused = jnp.concatenate([
        jnp.concatenate([iF, Zh, fF, Zh, oF, Zh, gF, Zh], axis=1),     # rows: h_f
        jnp.concatenate([Zh, iB, Zh, fB, Zh, oB, Zh, gB], axis=1),     # rows: h_b
    ], axis=0)                                                         # (2Hh, 8Hh)

    biF, bfF, bgF, boF = split_gates(params["b_f"])
    biB, bfB, bgB, boB = split_gates(params["b_b"])
    bias_fused = jnp.concatenate(
        [biF, biB, bfF, bfB, boF, boB, bgF, bgB], axis=1)              # (1, 8Hh)

    # block-diagonal fused heads: [label | proj] @ [[w_tp 0], [0 w_tw]]
    Zt = jnp.zeros((H, D), f32)
    w_top_fused = jnp.concatenate([
        jnp.concatenate([params["w_tp"], Zt], axis=1),
        jnp.concatenate([Zt, params["w_tw"]], axis=1),
    ], axis=0)                                                         # (2H, 2D)
    b_top_fused = jnp.concatenate([params["b_tp"], params["b_tw"]], axis=1)

    off_emb = 0
    off_wih = off_emb + r16(V)
    off_whh = off_wih + r16(2 * E)
    off_bg = off_whh + r16(H)
    off_wproj = off_bg + 16
    off_bproj = off_wproj + r16(E)
    off_wtop = off_bproj + 16
    off_btop = off_wtop + r16(2 * H)
    rows = off_btop + 16

    slab = jnp.zeros((rows, W_slab), f32)
    slab = slab.at[off_emb:off_emb + V, 0:E].set(emb)
    slab = slab.at[off_wih:off_wih + E, 0:G].set(w_ih_fwd)
    slab = slab.at[off_wih + E:off_wih + 2 * E, 0:G].set(w_ih_bwd)
    slab = slab.at[off_whh:off_whh + H, 0:G].set(w_hh_fused)
    slab = slab.at[off_bg:off_bg + 1, 0:G].set(bias_fused)
    slab = slab.at[off_wproj:off_wproj + E, 0:H].set(params["w_proj"])
    slab = slab.at[off_bproj:off_bproj + 1, 0:H].set(params["b_proj"])
    slab = slab.at[off_wtop:off_wtop + 2 * H, 0:2 * D].set(w_top_fused)
    slab = slab.at[off_btop:off_btop + 1, 0:2 * D].set(b_top_fused)
    slab = slab.astype(jnp.bfloat16)          # bf16 MXU operands; accumulation stays f32

    cfg = dict(E=E, Hh=Hh, V=V, D=D, W_out=W_out,
               off_emb=off_emb, off_wih=off_wih, off_whh=off_whh, off_bg=off_bg,
               off_wproj=off_wproj, off_bproj=off_bproj,
               off_wtop=off_wtop, off_btop=off_btop)
    return slab, cfg


def build_forward(cfg):
    """Build the jitted per-call forward for a fixed weight layout `cfg`."""
    E, Hh, V, D, W_out = cfg["E"], cfg["Hh"], cfg["V"], cfg["D"], cfg["W_out"]

    @jax.jit
    def forward(slab, path, word, lengths):
        """path: (B, T) int32, word: (B,) int32, lengths: (B,) int32."""
        B, T = path.shape
        Bp = max(8, _round_up(B, 8))              # full 8-sublane vregs

        # tiny int32 glue only: [fwd ids | bwd (time-reversed) ids | word | lengths]
        path_p = jnp.pad(path.astype(jnp.int32), ((0, Bp - B), (0, 0)))   # (Bp, T)
        fwd = path_p.T                                                    # row s = x(s)
        bwd = fwd[::-1]                                                   # row s = x(T-1-s)
        word_p = jnp.pad(word.astype(jnp.int32), (0, Bp - B))
        len_p = jnp.pad(lengths.astype(jnp.int32), (0, Bp - B))
        ids = jnp.concatenate(
            [fwd.reshape(-1), bwd.reshape(-1), word_p, len_p]).reshape(-1, 1)

        kernel = functools.partial(
            _test_embedding_reg_kernel,
            T=T, Bp=Bp, E=E, Hh=Hh, V=V, W_out=W_out,
            off_emb=cfg["off_emb"], off_wih=cfg["off_wih"],
            off_whh=cfg["off_whh"], off_bg=cfg["off_bg"],
            off_wproj=cfg["off_wproj"], off_bproj=cfg["off_bproj"],
            off_wtop=cfg["off_wtop"], off_btop=cfg["off_btop"],
        )
        vmem = pl.BlockSpec(memory_space=pltpu.MemorySpace.VMEM)
        # NOTE: at real model sizes add a grid over the (padded) batch axis with
        # BlockSpec tiling + dimension_semantics=("parallel",) so v7x's 2 TCs are
        # used, budget tiles against v7x's 64 MiB VMEM (inputs double-buffered),
        # and on v6e size the fused gate width (8*Hh) to multiples of 256.
        # Everything here is < 0.2 MiB, so a single untiled call is used.
        out = pl.pallas_call(
            kernel,
            out_shape=jax.ShapeDtypeStruct((Bp, W_out), jnp.float32),
            in_specs=[vmem, vmem],
            out_specs=vmem,
            scratch_shapes=[pltpu.VMEM((T * Bp, 8 * Hh), jnp.float32)],
        )(ids, slab)

        path_out = out[:B, 0:D]
        word_out = out[:B, D:2 * D]
        return word_out, path_out

    return forward


def _reference_forward(params, path, word, lengths):
    """Pure-JAX f32 reference of the original (unfused) math, for a sanity check."""
    emb = params["embedding"]
    B, T = path.shape
    Hh = params["w_hh_f"].shape[0]
    pe = jnp.take(emb, path, axis=0)                  # (B, T, E)

    def run_dir(w_ih, w_hh, b, times):
        h = jnp.zeros((B, Hh), jnp.float32)
        c = jnp.zeros((B, Hh), jnp.float32)
        for t in times:
            x = pe[:, t, :]
            gates = x @ w_ih + h @ w_hh + b
            i = jax.nn.sigmoid(gates[:, 0:Hh])
            f = jax.nn.sigmoid(gates[:, Hh:2 * Hh])
            g = jnp.tanh(gates[:, 2 * Hh:3 * Hh])
            o = jax.nn.sigmoid(gates[:, 3 * Hh:4 * Hh])
            c2 = f * c + i * g
            h2 = o * jnp.tanh(c2)
            m = (t < lengths)[:, None]
            h = jnp.where(m, h2, h)
            c = jnp.where(m, c2, c)
        return h

    h_f = run_dir(params["w_ih_f"], params["w_hh_f"], params["b_f"], range(T))
    h_b = run_dir(params["w_ih_b"], params["w_hh_b"], params["b_b"],
                  range(T - 1, -1, -1))
    label = jnp.clip(jnp.concatenate([h_f, h_b], axis=1), -1.0, 1.0)
    path_out = label @ params["w_tp"] + params["b_tp"]
    we = jnp.clip(jnp.take(emb, word, axis=0), -1.0, 1.0)
    proj = jnp.clip(we @ params["w_proj"] + params["b_proj"], -1.0, 1.0)
    word_out = proj @ params["w_tw"] + params["b_tw"]
    return word_out, path_out


def init_params(key, V, E, H, D):
    """Deterministic synthetic parameters matching TestEmbeddingReg's shapes."""
    Hh = H // 2
    ks = jax.random.split(key, 13)

    def rnd(k, shape, scale=0.1):
        return (scale * jax.random.normal(k, shape)).astype(jnp.float32)

    emb = rnd(ks[0], (V, E), 1.0)
    emb = emb.at[0].set(0.0)        # padding_idx = 0
    return dict(
        embedding=emb,
        # LSTM (bidirectional, hidden = H//2 per direction); weights stored as
        # (in_features, 4*Hh) with PyTorch gate order i,f,g,o; b = b_ih + b_hh
        w_ih_f=rnd(ks[1], (E, 4 * Hh)),
        w_hh_f=rnd(ks[2], (Hh, 4 * Hh)),
        b_f=rnd(ks[3], (1, 4 * Hh)),
        w_ih_b=rnd(ks[4], (E, 4 * Hh)),
        w_hh_b=rnd(ks[5], (Hh, 4 * Hh)),
        b_b=rnd(ks[6], (1, 4 * Hh)),
        # project: Linear(E, H);  top_word / top_path: Linear(H, D)
        w_proj=rnd(ks[7], (E, H)),
        b_proj=rnd(ks[8], (1, H)),
        w_tw=rnd(ks[9], (H, D)),
        b_tw=rnd(ks[10], (1, D)),
        w_tp=rnd(ks[11], (H, D)),
        b_tp=rnd(ks[12], (1, D)),
    )


if __name__ == "__main__":
    B, T, V, E, H, D = 4, 8, 32, 32, 32, 16   # batch, path_len, vocab, d_emb, d_hidden, d_out
    key = jax.random.PRNGKey(0)
    k_params, k_word, k_path = jax.random.split(key, 3)

    params = init_params(k_params, V, E, H, D)

    # one-time weight packing (would be cached per parameter set in a real run);
    # the per-call forward only builds the tiny int32 id vector + one pallas_call.
    slab, cfg = pack_params(params)
    forward = build_forward(cfg)

    lengths = jnp.array([8, 5, 3, 1], dtype=jnp.int32)          # (B,)
    path = jax.random.randint(k_path, (B, T), 1, V, dtype=jnp.int32)
    t_idx = jnp.arange(T)[None, :]
    path = jnp.where(t_idx < lengths[:, None], path, 0)         # pad with idx 0
    word = jax.random.randint(k_word, (B,), 1, V, dtype=jnp.int32)

    word_out, path_out = forward(slab, path, word, lengths)
    jax.block_until_ready((word_out, path_out))
    assert word_out.shape == (B, D) and path_out.shape == (B, D)

    # sanity check against the unfused pure-JAX f32 reference (bf16 MXU operands
    # in the kernel; f32 accumulation + f32 pointwise keep error well inside 2e-2)
    word_exp, path_exp = _reference_forward(params, path, word, lengths)
    import numpy as np
    np.testing.assert_allclose(np.asarray(word_out), np.asarray(word_exp),
                               atol=2e-2, rtol=0)
    np.testing.assert_allclose(np.asarray(path_out), np.asarray(path_exp),
                               atol=2e-2, rtol=0)

    print("KERNEL_OK")
</pallas_src>

<mosaic_0001>
module attributes {stable_mosaic.version = 11 : i64} {
  func.func @_test_embedding_reg_kernel(%arg0: memref<144x1xi32, #tpu.memory_space<vmem>>, %arg1: memref<272x128xbf16, #tpu.memory_space<vmem>>, %arg2: memref<8x128xf32, #tpu.memory_space<vmem>>, %arg3: memref<64x128xf32, #tpu.memory_space<vmem>>) attributes {dimension_semantics = [], scalar_prefetch = 0 : i64, scratch_operands = 1 : i64, tpu.core_type = #tpu.core_type<tc>} {
    %c0 = arith.constant 0 : index
    %c0_0 = arith.constant 0 : index
    %0 = vector.load %arg1[%c0, %c0_0] : memref<272x128xbf16, #tpu.memory_space<vmem>>, vector<32x32xbf16>
    %c32 = arith.constant 32 : index
    %c0_1 = arith.constant 0 : index
    %1 = vector.load %arg1[%c32, %c0_1] : memref<272x128xbf16, #tpu.memory_space<vmem>>, vector<32x128xbf16>
    %c64 = arith.constant 64 : index
    %c0_2 = arith.constant 0 : index
    %2 = vector.load %arg1[%c64, %c0_2] : memref<272x128xbf16, #tpu.memory_space<vmem>>, vector<32x128xbf16>
    %c96 = arith.constant 96 : index
    %c0_3 = arith.constant 0 : index
    %3 = vector.load %arg1[%c96, %c0_3] : memref<272x128xbf16, #tpu.memory_space<vmem>>, vector<32x128xbf16>
    %c128 = arith.constant 128 : index
    %c0_4 = arith.constant 0 : index
    %4 = vector.load %arg1[%c128, %c0_4] : memref<272x128xbf16, #tpu.memory_space<vmem>>, vector<1x128xbf16>
    %5 = arith.extf %4 : vector<1x128xbf16> to vector<1x128xf32>
    %c144 = arith.constant 144 : index
    %c0_5 = arith.constant 0 : index
    %6 = vector.load %arg1[%c144, %c0_5] : memref<272x128xbf16, #tpu.memory_space<vmem>>, vector<32x32xbf16>
    %c176 = arith.constant 176 : index
    %c0_6 = arith.constant 0 : index
    %7 = vector.load %arg1[%c176, %c0_6] : memref<272x128xbf16, #tpu.memory_space<vmem>>, vector<1x32xbf16>
    %8 = arith.extf %7 : vector<1x32xbf16> to vector<1x32xf32>
    %c192 = arith.constant 192 : index
    %c0_7 = arith.constant 0 : index
    %9 = vector.load %arg1[%c192, %c0_7] : memref<272x128xbf16, #tpu.memory_space<vmem>>, vector<64x128xbf16>
    %c256 = arith.constant 256 : index
    %c0_8 = arith.constant 0 : index
    %10 = vector.load %arg1[%c256, %c0_8] : memref<272x128xbf16, #tpu.memory_space<vmem>>, vector<1x128xbf16>
    %11 = arith.extf %10 : vector<1x128xbf16> to vector<1x128xf32>
    %c0_9 = arith.constant 0 : index
    %c0_10 = arith.constant 0 : index
    %12 = vector.load %arg0[%c0_9, %c0_10] : memref<144x1xi32, #tpu.memory_space<vmem>>, vector<136x1xi32>
    %c136 = arith.constant 136 : index
    %c0_11 = arith.constant 0 : index
    %13 = vector.load %arg0[%c136, %c0_11] : memref<144x1xi32, #tpu.memory_space<vmem>>, vector<8x1xi32>
    %14 = tpu.iota {dimensions = array<i32: 1>} : vector<136x32xi32>
    %15 = vector.broadcast %12 : vector<136x1xi32> to vector<136x32xi32>
    %16 = arith.cmpi eq, %14, %15 : vector<136x32xi32>
    %17 = arith.extui %16 : vector<136x32xi1> to vector<136x32xi32>
    %18 = arith.sitofp %17 : vector<136x32xi32> to vector<136x32xf32>
    %19 = arith.truncf %18 : vector<136x32xf32> to vector<136x32xbf16>
    %cst = arith.constant dense<0.000000e+00> : vector<136x32xf32>
    %20 = tpu.matmul %19, %0, %cst {dimension_numbers = #tpu.dot_dimension_numbers<[1], [0], [0], [1], [0, 0, 1, 1], [], []>} : vector<136x32xbf16>, vector<32x32xbf16>, vector<136x32xf32> -> vector<136x32xf32>
    %21 = arith.truncf %20 : vector<136x32xf32> to vector<136x32xbf16>
    %22 = vector.extract_strided_slice %21 {offsets = [0, 0], sizes = [64, 32], strides = [1, 1]} : vector<136x32xbf16> to vector<64x32xbf16>
    %23 = vector.extract_strided_slice %21 {offsets = [64, 0], sizes = [64, 32], strides = [1, 1]} : vector<136x32xbf16> to vector<64x32xbf16>
    %cst_12 = arith.constant dense<0.000000e+00> : vector<64x128xf32>
    %24 = tpu.matmul %22, %1, %cst_12 {dimension_numbers = #tpu.dot_dimension_numbers<[1], [0], [0], [1], [0, 0, 1, 1], [], []>} : vector<64x32xbf16>, vector<32x128xbf16>, vector<64x128xf32> -> vector<64x128xf32>
    %cst_13 = arith.constant dense<0.000000e+00> : vector<64x128xf32>
    %25 = tpu.matmul %23, %2, %cst_13 {dimension_numbers = #tpu.dot_dimension_numbers<[1], [0], [0], [1], [0, 0, 1, 1], [], []>} : vector<64x32xbf16>, vector<32x128xbf16>, vector<64x128xf32> -> vector<64x128xf32>
    %26 = arith.addf %24, %25 : vector<64x128xf32>
    %27 = vector.broadcast %5 : vector<1x128xf32> to vector<64x128xf32>
    %28 = arith.addf %26, %27 : vector<64x128xf32>
    %c0_14 = arith.constant 0 : index
    %c0_15 = arith.constant 0 : index
    %29 = vector.load %arg3[%c0_14, %c0_15] : memref<64x128xf32, #tpu.memory_space<vmem>>, vector<64x128xf32>
    tpu.vector_store %arg3[%c0_14, %c0_15], %28 {strides = array<i32>} : memref<64x128xf32, #tpu.memory_space<vmem>>, vector<64x128xf32>,
    %30 = tpu.iota {dimensions = array<i32: 1>} : vector<8x32xi32>
    %c16_i32 = arith.constant 16 : i32
    %31 = vector.broadcast %c16_i32 : i32 to vector<8x32xi32>
    %32 = arith.cmpi slt, %30, %31 : vector<8x32xi32>
    %c0_i32 = arith.constant 0 : i32
    %c7_i32 = arith.constant 7 : i32
    %33 = vector.broadcast %c0_i32 : i32 to vector<8x32xi32>
    %34 = vector.broadcast %c7_i32 : i32 to vector<8x32xi32>
    %35 = arith.select %32, %33, %34 : vector<8x32xi1>, vector<8x32xi32>
    %36 = vector.broadcast %13 : vector<8x1xi32> to vector<8x32xi32>
    %37 = arith.cmpi slt, %35, %36 : vector<8x32xi32>
    %c1_i32 = arith.constant 1 : i32
    %c6_i32 = arith.constant 6 : i32
    %38 = vector.broadcast %c1_i32 : i32 to vector<8x32xi32>
    %39 = vector.broadcast %c6_i32 : i32 to vector<8x32xi32>
    %40 = arith.select %32, %38, %39 : vector<8x32xi1>, vector<8x32xi32>
    %41 = vector.broadcast %13 : vector<8x1xi32> to vector<8x32xi32>
    %42 = arith.cmpi slt, %40, %41 : vector<8x32xi32>
    %c2_i32 = arith.constant 2 : i32
    %c5_i32 = arith.constant 5 : i32
    %43 = vector.broadcast %c2_i32 : i32 to vector<8x32xi32>
    %44 = vector.broadcast %c5_i32 : i32 to vector<8x32xi32>
    %45 = arith.select %32, %43, %44 : vector<8x32xi1>, vector<8x32xi32>
    %46 = vector.broadcast %13 : vector<8x1xi32> to vector<8x32xi32>
    %47 = arith.cmpi slt, %45, %46 : vector<8x32xi32>
    %c3_i32 = arith.constant 3 : i32
    %c4_i32 = arith.constant 4 : i32
    %48 = vector.broadcast %c3_i32 : i32 to vector<8x32xi32>
    %49 = vector.broadcast %c4_i32 : i32 to vector<8x32xi32>
    %50 = arith.select %32, %48, %49 : vector<8x32xi1>, vector<8x32xi32>
    %51 = vector.broadcast %13 : vector<8x1xi32> to vector<8x32xi32>
    %52 = arith.cmpi slt, %50, %51 : vector<8x32xi32>
    %c4_i32_16 = arith.constant 4 : i32
    %c3_i32_17 = arith.constant 3 : i32
    %53 = vector.broadcast %c4_i32_16 : i32 to vector<8x32xi32>
    %54 = vector.broadcast %c3_i32_17 : i32 to vector<8x32xi32>
    %55 = arith.select %32, %53, %54 : vector<8x32xi1>, vector<8x32xi32>
    %56 = vector.broadcast %13 : vector<8x1xi32> to vector<8x32xi32>
    %57 = arith.cmpi slt, %55, %56 : vector<8x32xi32>
    %c5_i32_18 = arith.constant 5 : i32
    %c2_i32_19 = arith.constant 2 : i32
    %58 = vector.broadcast %c5_i32_18 : i32 to vector<8x32xi32>
    %59 = vector.broadcast %c2_i32_19 : i32 to vector<8x32xi32>
    %60 = arith.select %32, %58, %59 : vector<8x32xi1>, vector<8x32xi32>
    %61 = vector.broadcast %13 : vector<8x1xi32> to vector<8x32xi32>
    %62 = arith.cmpi slt, %60, %61 : vector<8x32xi32>
    %c6_i32_20 = arith.constant 6 : i32
    %c1_i32_21 = arith.constant 1 : i32
    %63 = vector.broadcast %c6_i32_20 : i32 to vector<8x32xi32>
    %64 = vector.broadcast %c1_i32_21 : i32 to vector<8x32xi32>
    %65 = arith.select %32, %63, %64 : vector<8x32xi1>, vector<8x32xi32>
    %66 = vector.broadcast %13 : vector<8x1xi32> to vector<8x32xi32>
    %67 = arith.cmpi slt, %65, %66 : vector<8x32xi32>
    %c7_i32_22 = arith.constant 7 : i32
    %c0_i32_23 = arith.constant 0 : i32
    %68 = vector.broadcast %c7_i32_22 : i32 to vector<8x32xi32>
    %69 = vector.broadcast %c0_i32_23 : i32 to vector<8x32xi32>
    %70 = arith.select %32, %68, %69 : vector<8x32xi1>, vector<8x32xi32>
    %71 = vector.broadcast %13 : vector<8x1xi32> to vector<8x32xi32>
    %72 = arith.cmpi slt, %70, %71 : vector<8x32xi32>
    %cst_24 = arith.constant 0.000000e+00 : f32
    %73 = vector.broadcast %cst_24 : f32 to vector<8x32xf32>
    %cst_25 = arith.constant 0.000000e+00 : f32
    %74 = vector.broadcast %cst_25 : f32 to vector<8x32xf32>
    %c0_26 = arith.constant 0 : index
    %c0_27 = arith.constant 0 : index
    %75 = vector.load %arg3[%c0_26, %c0_27] : memref<64x128xf32, #tpu.memory_space<vmem>>, vector<8x128xf32>
    %76 = arith.truncf %73 : vector<8x32xf32> to vector<8x32xbf16>
    %cst_28 = arith.constant dense<0.000000e+00> : vector<8x128xf32>
    %77 = tpu.matmul %76, %3, %cst_28 {dimension_numbers = #tpu.dot_dimension_numbers<[1], [0], [0], [1], [0, 0, 1, 1], [], []>} : vector<8x32xbf16>, vector<32x128xbf16>, vector<8x128xf32> -> vector<8x128xf32>
    %78 = arith.addf %75, %77 : vector<8x128xf32>
    %79 = vector.extract_strided_slice %78 {offsets = [0, 0], sizes = [8, 96], strides = [1, 1]} : vector<8x128xf32> to vector<8x96xf32>
    %80 = arith.negf %79 : vector<8x96xf32>
    %81 = math.exp %80 : vector<8x96xf32>
    %cst_29 = arith.constant 1.000000e+00 : f32
    %82 = vector.broadcast %cst_29 : f32 to vector<8x96xf32>
    %83 = arith.addf %82, %81 : vector<8x96xf32>
    %84 = arith.divf %82, %83 : vector<8x96xf32>
    %85 = vector.extract_strided_slice %78 {offsets = [0, 96], sizes = [8, 32], strides = [1, 1]} : vector<8x128xf32> to vector<8x32xf32>
    %86 = math.tanh %85 : vector<8x32xf32>
    %87 = vector.extract_strided_slice %84 {offsets = [0, 0], sizes = [8, 32], strides = [1, 1]} : vector<8x96xf32> to vector<8x32xf32>
    %88 = vector.extract_strided_slice %84 {offsets = [0, 32], sizes = [8, 32], strides = [1, 1]} : vector<8x96xf32> to vector<8x32xf32>
    %89 = vector.extract_strided_slice %84 {offsets = [0, 64], sizes = [8, 32], strides = [1, 1]} : vector<8x96xf32> to vector<8x32xf32>
    %90 = arith.mulf %88, %74 : vector<8x32xf32>
    %91 = arith.mulf %87, %86 : vector<8x32xf32>
    %92 = arith.addf %90, %91 : vector<8x32xf32>
    %93 = math.tanh %92 : vector<8x32xf32>
    %94 = arith.mulf %89, %93 : vector<8x32xf32>
    %95 = arith.select %37, %94, %73 : vector<8x32xi1>, vector<8x32xf32>
    %96 = arith.select %37, %92, %74 : vector<8x32xi1>, vector<8x32xf32>
    %c8 = arith.constant 8 : index
    %c0_30 = arith.constant 0 : index
    %97 = vector.load %arg3[%c8, %c0_30] : memref<64x128xf32, #tpu.memory_space<vmem>>, vector<8x128xf32>
    %98 = arith.truncf %95 : vector<8x32xf32> to vector<8x32xbf16>
    %cst_31 = arith.constant dense<0.000000e+00> : vector<8x128xf32>
    %99 = tpu.matmul %98, %3, %cst_31 {dimension_numbers = #tpu.dot_dimension_numbers<[1], [0], [0], [1], [0, 0, 1, 1], [], []>} : vector<8x32xbf16>, vector<32x128xbf16>, vector<8x128xf32> -> vector<8x128xf32>
    %100 = arith.addf %97, %99 : vector<8x128xf32>
    %101 = vector.extract_strided_slice %100 {offsets = [0, 0], sizes = [8, 96], strides = [1, 1]} : vector<8x128xf32> to vector<8x96xf32>
    %102 = arith.negf %101 : vector<8x96xf32>
    %103 = math.exp %102 : vector<8x96xf32>
    %cst_32 = arith.constant 1.000000e+00 : f32
    %104 = vector.broadcast %cst_32 : f32 to vector<8x96xf32>
    %105 = arith.addf %104, %103 : vector<8x96xf32>
    %106 = arith.divf %104, %105 : vector<8x96xf32>
    %107 = vector.extract_strided_slice %100 {offsets = [0, 96], sizes = [8, 32], strides = [1, 1]} : vector<8x128xf32> to vector<8x32xf32>
    %108 = math.tanh %107 : vector<8x32xf32>
    %109 = vector.extract_strided_slice %106 {offsets = [0, 0], sizes = [8, 32], strides = [1, 1]} : vector<8x96xf32> to vector<8x32xf32>
    %110 = vector.extract_strided_slice %106 {offsets = [0, 32], sizes = [8, 32], strides = [1, 1]} : vector<8x96xf32> to vector<8x32xf32>
    %111 = vector.extract_strided_slice %106 {offsets = [0, 64], sizes = [8, 32], strides = [1, 1]} : vector<8x96xf32> to vector<8x32xf32>
    %112 = arith.mulf %110, %96 : vector<8x32xf32>
    %113 = arith.mulf %109, %108 : vector<8x32xf32>
    %114 = arith.addf %112, %113 : vector<8x32xf32>
    %115 = math.tanh %114 : vector<8x32xf32>
    %116 = arith.mulf %111, %115 : vector<8x32xf32>
    %117 = arith.select %42, %116, %95 : vector<8x32xi1>, vector<8x32xf32>
    %118 = arith.select %42, %114, %96 : vector<8x32xi1>, vector<8x32xf32>
    %c16 = arith.constant 16 : index
    %c0_33 = arith.constant 0 : index
    %119 = vector.load %arg3[%c16, %c0_33] : memref<64x128xf32, #tpu.memory_space<vmem>>, vector<8x128xf32>
    %120 = arith.truncf %117 : vector<8x32xf32> to vector<8x32xbf16>
    %cst_34 = arith.constant dense<0.000000e+00> : vector<8x128xf32>
    %121 = tpu.matmul %120, %3, %cst_34 {dimension_numbers = #tpu.dot_dimension_numbers<[1], [0], [0], [1], [0, 0, 1, 1], [], []>} : vector<8x32xbf16>, vector<32x128xbf16>, vector<8x128xf32> -> vector<8x128xf32>
    %122 = arith.addf %119, %121 : vector<8x128xf32>
    %123 = vector.extract_strided_slice %122 {offsets = [0, 0], sizes = [8, 96], strides = [1, 1]} : vector<8x128xf32> to vector<8x96xf32>
    %124 = arith.negf %123 : vector<8x96xf32>
    %125 = math.exp %124 : vector<8x96xf32>
    %cst_35 = arith.constant 1.000000e+00 : f32
    %126 = vector.broadcast %cst_35 : f32 to vector<8x96xf32>
    %127 = arith.addf %126, %125 : vector<8x96xf32>
    %128 = arith.divf %126, %127 : vector<8x96xf32>
    %129 = vector.extract_strided_slice %122 {offsets = [0, 96], sizes = [8, 32], strides = [1, 1]} : vector<8x128xf32> to vector<8x32xf32>
    %130 = math.tanh %129 : vector<8x32xf32>
    %131 = vector.extract_strided_slice %128 {offsets = [0, 0], sizes = [8, 32], strides = [1, 1]} : vector<8x96xf32> to vector<8x32xf32>
    %132 = vector.extract_strided_slice %128 {offsets = [0, 32], sizes = [8, 32], strides = [1, 1]} : vector<8x96xf32> to vector<8x32xf32>
    %133 = vector.extract_strided_slice %128 {offsets = [0, 64], sizes = [8, 32], strides = [1, 1]} : vector<8x96xf32> to vector<8x32xf32>
    %134 = arith.mulf %132, %118 : vector<8x32xf32>
    %135 = arith.mulf %131, %130 : vector<8x32xf32>
    %136 = arith.addf %134, %135 : vector<8x32xf32>
    %137 = math.tanh %136 : vector<8x32xf32>
    %138 = arith.mulf %133, %137 : vector<8x32xf32>
    %139 = arith.select %47, %138, %117 : vector<8x32xi1>, vector<8x32xf32>
    %140 = arith.select %47, %136, %118 : vector<8x32xi1>, vector<8x32xf32>
    %c24 = arith.constant 24 : index
    %c0_36 = arith.constant 0 : index
    %141 = vector.load %arg3[%c24, %c0_36] : memref<64x128xf32, #tpu.memory_space<vmem>>, vector<8x128xf32>
    %142 = arith.truncf %139 : vector<8x32xf32> to vector<8x32xbf16>
    %cst_37 = arith.constant dense<0.000000e+00> : vector<8x128xf32>
    %143 = tpu.matmul %142, %3, %cst_37 {dimension_numbers = #tpu.dot_dimension_numbers<[1], [0], [0], [1], [0, 0, 1, 1], [], []>} : vector<8x32xbf16>, vector<32x128xbf16>, vector<8x128xf32> -> vector<8x128xf32>
    %144 = arith.addf %141, %143 : vector<8x128xf32>
    %145 = vector.extract_strided_slice %144 {offsets = [0, 0], sizes = [8, 96], strides = [1, 1]} : vector<8x128xf32> to vector<8x96xf32>
    %146 = arith.negf %145 : vector<8x96xf32>
    %147 = math.exp %146 : vector<8x96xf32>
    %cst_38 = arith.constant 1.000000e+00 : f32
    %148 = vector.broadcast %cst_38 : f32 to vector<8x96xf32>
    %149 = arith.addf %148, %147 : vector<8x96xf32>
    %150 = arith.divf %148, %149 : vector<8x96xf32>
    %151 = vector.extract_strided_slice %144 {offsets = [0, 96], sizes = [8, 32], strides = [1, 1]} : vector<8x128xf32> to vector<8x32xf32>
    %152 = math.tanh %151 : vector<8x32xf32>
    %153 = vector.extract_strided_slice %150 {offsets = [0, 0], sizes = [8, 32], strides = [1, 1]} : vector<8x96xf32> to vector<8x32xf32>
    %154 = vector.extract_strided_slice %150 {offsets = [0, 32], sizes = [8, 32], strides = [1, 1]} : vector<8x96xf32> to vector<8x32xf32>
    %155 = vector.extract_strided_slice %150 {offsets = [0, 64], sizes = [8, 32], strides = [1, 1]} : vector<8x96xf32> to vector<8x32xf32>
    %156 = arith.mulf %154, %140 : vector<8x32xf32>
    %157 = arith.mulf %153, %152 : vector<8x32xf32>
    %158 = arith.addf %156, %157 : vector<8x32xf32>
    %159 = math.tanh %158 : vector<8x32xf32>
    %160 = arith.mulf %155, %159 : vector<8x32xf32>
    %161 = arith.select %52, %160, %139 : vector<8x32xi1>, vector<8x32xf32>
    %162 = arith.select %52, %158, %140 : vector<8x32xi1>, vector<8x32xf32>
    %c32_39 = arith.constant 32 : index
    %c0_40 = arith.constant 0 : index
    %163 = vector.load %arg3[%c32_39, %c0_40] : memref<64x128xf32, #tpu.memory_space<vmem>>, vector<8x128xf32>
    %164 = arith.truncf %161 : vector<8x32xf32> to vector<8x32xbf16>
    %cst_41 = arith.constant dense<0.000000e+00> : vector<8x128xf32>
    %165 = tpu.matmul %164, %3, %cst_41 {dimension_numbers = #tpu.dot_dimension_numbers<[1], [0], [0], [1], [0, 0, 1, 1], [], []>} : vector<8x32xbf16>, vector<32x128xbf16>, vector<8x128xf32> -> vector<8x128xf32>
    %166 = arith.addf %163, %165 : vector<8x128xf32>
    %167 = vector.extract_strided_slice %166 {offsets = [0, 0], sizes = [8, 96], strides = [1, 1]} : vector<8x128xf32> to vector<8x96xf32>
    %168 = arith.negf %167 : vector<8x96xf32>
    %169 = math.exp %168 : vector<8x96xf32>
    %cst_42 = arith.constant 1.000000e+00 : f32
    %170 = vector.broadcast %cst_42 : f32 to vector<8x96xf32>
    %171 = arith.addf %170, %169 : vector<8x96xf32>
    %172 = arith.divf %170, %171 : vector<8x96xf32>
    %173 = vector.extract_strided_slice %166 {offsets = [0, 96], sizes = [8, 32], strides = [1, 1]} : vector<8x128xf32> to vector<8x32xf32>
    %174 = math.tanh %173 : vector<8x32xf32>
    %175 = vector.extract_strided_slice %172 {offsets = [0, 0], sizes = [8, 32], strides = [1, 1]} : vector<8x96xf32> to vector<8x32xf32>
    %176 = vector.extract_strided_slice %172 {offsets = [0, 32], sizes = [8, 32], strides = [1, 1]} : vector<8x96xf32> to vector<8x32xf32>
    %177 = vector.extract_strided_slice %172 {offsets = [0, 64], sizes = [8, 32], strides = [1, 1]} : vector<8x96xf32> to vector<8x32xf32>
    %178 = arith.mulf %176, %162 : vector<8x32xf32>
    %179 = arith.mulf %175, %174 : vector<8x32xf32>
    %180 = arith.addf %178, %179 : vector<8x32xf32>
    %181 = math.tanh %180 : vector<8x32xf32>
    %182 = arith.mulf %177, %181 : vector<8x32xf32>
    %183 = arith.select %57, %182, %161 : vector<8x32xi1>, vector<8x32xf32>
    %184 = arith.select %57, %180, %162 : vector<8x32xi1>, vector<8x32xf32>
    %c40 = arith.constant 40 : index
    %c0_43 = arith.constant 0 : index
    %185 = vector.load %arg3[%c40, %c0_43] : memref<64x128xf32, #tpu.memory_space<vmem>>, vector<8x128xf32>
    %186 = arith.truncf %183 : vector<8x32xf32> to vector<8x32xbf16>
    %cst_44 = arith.constant dense<0.000000e+00> : vector<8x128xf32>
    %187 = tpu.matmul %186, %3, %cst_44 {dimension_numbers = #tpu.dot_dimension_numbers<[1], [0], [0], [1], [0, 0, 1, 1], [], []>} : vector<8x32xbf16>, vector<32x128xbf16>, vector<8x128xf32> -> vector<8x128xf32>
    %188 = arith.addf %185, %187 : vector<8x128xf32>
    %189 = vector.extract_strided_slice %188 {offsets = [0, 0], sizes = [8, 96], strides = [1, 1]} : vector<8x128xf32> to vector<8x96xf32>
    %190 = arith.negf %189 : vector<8x96xf32>
    %191 = math.exp %190 : vector<8x96xf32>
    %cst_45 = arith.constant 1.000000e+00 : f32
    %192 = vector.broadcast %cst_45 : f32 to vector<8x96xf32>
    %193 = arith.addf %192, %191 : vector<8x96xf32>
    %194 = arith.divf %192, %193 : vector<8x96xf32>
    %195 = vector.extract_strided_slice %188 {offsets = [0, 96], sizes = [8, 32], strides = [1, 1]} : vector<8x128xf32> to vector<8x32xf32>
    %196 = math.tanh %195 : vector<8x32xf32>
    %197 = vector.extract_strided_slice %194 {offsets = [0, 0], sizes = [8, 32], strides = [1, 1]} : vector<8x96xf32> to vector<8x32xf32>
    %198 = vector.extract_strided_slice %194 {offsets = [0, 32], sizes = [8, 32], strides = [1, 1]} : vector<8x96xf32> to vector<8x32xf32>
    %199 = vector.extract_strided_slice %194 {offsets = [0, 64], sizes = [8, 32], strides = [1, 1]} : vector<8x96xf32> to vector<8x32xf32>
    %200 = arith.mulf %198, %184 : vector<8x32xf32>
    %201 = arith.mulf %197, %196 : vector<8x32xf32>
    %202 = arith.addf %200, %201 : vector<8x32xf32>
    %203 = math.tanh %202 : vector<8x32xf32>
    %204 = arith.mulf %199, %203 : vector<8x32xf32>
    %205 = arith.select %62, %204, %183 : vector<8x32xi1>, vector<8x32xf32>
    %206 = arith.select %62, %202, %184 : vector<8x32xi1>, vector<8x32xf32>
    %c48 = arith.constant 48 : index
    %c0_46 = arith.constant 0 : index
    %207 = vector.load %arg3[%c48, %c0_46] : memref<64x128xf32, #tpu.memory_space<vmem>>, vector<8x128xf32>
    %208 = arith.truncf %205 : vector<8x32xf32> to vector<8x32xbf16>
    %cst_47 = arith.constant dense<0.000000e+00> : vector<8x128xf32>
    %209 = tpu.matmul %208, %3, %cst_47 {dimension_numbers = #tpu.dot_dimension_numbers<[1], [0], [0], [1], [0, 0, 1, 1], [], []>} : vector<8x32xbf16>, vector<32x128xbf16>, vector<8x128xf32> -> vector<8x128xf32>
    %210 = arith.addf %207, %209 : vector<8x128xf32>
    %211 = vector.extract_strided_slice %210 {offsets = [0, 0], sizes = [8, 96], strides = [1, 1]} : vector<8x128xf32> to vector<8x96xf32>
    %212 = arith.negf %211 : vector<8x96xf32>
    %213 = math.exp %212 : vector<8x96xf32>
    %cst_48 = arith.constant 1.000000e+00 : f32
    %214 = vector.broadcast %cst_48 : f32 to vector<8x96xf32>
    %215 = arith.addf %214, %213 : vector<8x96xf32>
    %216 = arith.divf %214, %215 : vector<8x96xf32>
    %217 = vector.extract_strided_slice %210 {offsets = [0, 96], sizes = [8, 32], strides = [1, 1]} : vector<8x128xf32> to vector<8x32xf32>
    %218 = math.tanh %217 : vector<8x32xf32>
    %219 = vector.extract_strided_slice %216 {offsets = [0, 0], sizes = [8, 32], strides = [1, 1]} : vector<8x96xf32> to vector<8x32xf32>
    %220 = vector.extract_strided_slice %216 {offsets = [0, 32], sizes = [8, 32], strides = [1, 1]} : vector<8x96xf32> to vector<8x32xf32>
    %221 = vector.extract_strided_slice %216 {offsets = [0, 64], sizes = [8, 32], strides = [1, 1]} : vector<8x96xf32> to vector<8x32xf32>
    %222 = arith.mulf %220, %206 : vector<8x32xf32>
    %223 = arith.mulf %219, %218 : vector<8x32xf32>
    %224 = arith.addf %222, %223 : vector<8x32xf32>
    %225 = math.tanh %224 : vector<8x32xf32>
    %226 = arith.mulf %221, %225 : vector<8x32xf32>
    %227 = arith.select %67, %226, %205 : vector<8x32xi1>, vector<8x32xf32>
    %228 = arith.select %67, %224, %206 : vector<8x32xi1>, vector<8x32xf32>
    %c56 = arith.constant 56 : index
    %c0_49 = arith.constant 0 : index
    %229 = vector.load %arg3[%c56, %c0_49] : memref<64x128xf32, #tpu.memory_space<vmem>>, vector<8x128xf32>
    %230 = arith.truncf %227 : vector<8x32xf32> to vector<8x32xbf16>
    %cst_50 = arith.constant dense<0.000000e+00> : vector<8x128xf32>
    %231 = tpu.matmul %230, %3, %cst_50 {dimension_numbers = #tpu.dot_dimension_numbers<[1], [0], [0], [1], [0, 0, 1, 1], [], []>} : vector<8x32xbf16>, vector<32x128xbf16>, vector<8x128xf32> -> vector<8x128xf32>
    %232 = arith.addf %229, %231 : vector<8x128xf32>
    %233 = vector.extract_strided_slice %232 {offsets = [0, 0], sizes = [8, 96], strides = [1, 1]} : vector<8x128xf32> to vector<8x96xf32>
    %234 = arith.negf %233 : vector<8x96xf32>
    %235 = math.exp %234 : vector<8x96xf32>
    %cst_51 = arith.constant 1.000000e+00 : f32
    %236 = vector.broadcast %cst_51 : f32 to vector<8x96xf32>
    %237 = arith.addf %236, %235 : vector<8x96xf32>
    %238 = arith.divf %236, %237 : vector<8x96xf32>
    %239 = vector.extract_strided_slice %232 {offsets = [0, 96], sizes = [8, 32], strides = [1, 1]} : vector<8x128xf32> to vector<8x32xf32>
    %240 = math.tanh %239 : vector<8x32xf32>
    %241 = vector.extract_strided_slice %238 {offsets = [0, 0], sizes = [8, 32], strides = [1, 1]} : vector<8x96xf32> to vector<8x32xf32>
    %242 = vector.extract_strided_slice %238 {offsets = [0, 32], sizes = [8, 32], strides = [1, 1]} : vector<8x96xf32> to vector<8x32xf32>
    %243 = vector.extract_strided_slice %238 {offsets = [0, 64], sizes = [8, 32], strides = [1, 1]} : vector<8x96xf32> to vector<8x32xf32>
    %244 = arith.mulf %242, %228 : vector<8x32xf32>
    %245 = arith.mulf %241, %240 : vector<8x32xf32>
    %246 = arith.addf %244, %245 : vector<8x32xf32>
    %247 = math.tanh %246 : vector<8x32xf32>
    %248 = arith.mulf %243, %247 : vector<8x32xf32>
    %249 = arith.select %72, %248, %227 : vector<8x32xi1>, vector<8x32xf32>
    %cst_52 = arith.constant -1.000000e+00 : f32
    %cst_53 = arith.constant 1.000000e+00 : f32
    %250 = vector.broadcast %cst_52 : f32 to vector<8x32xf32>
    %251 = arith.maximumf %250, %249 : vector<8x32xf32>
    %252 = vector.broadcast %cst_53 : f32 to vector<8x32xf32>
    %253 = arith.minimumf %252, %251 : vector<8x32xf32>
    %254 = vector.extract_strided_slice %20 {offsets = [128, 0], sizes = [8, 32], strides = [1, 1]} : vector<136x32xf32> to vector<8x32xf32>
    %cst_54 = arith.constant -1.000000e+00 : f32
    %cst_55 = arith.constant 1.000000e+00 : f32
    %255 = vector.broadcast %cst_54 : f32 to vector<8x32xf32>
    %256 = arith.maximumf %255, %254 : vector<8x32xf32>
    %257 = vector.broadcast %cst_55 : f32 to vector<8x32xf32>
    %258 = arith.minimumf %257, %256 : vector<8x32xf32>
    %259 = arith.truncf %258 : vector<8x32xf32> to vector<8x32xbf16>
    %cst_56 = arith.constant dense<0.000000e+00> : vector<8x32xf32>
    %260 = tpu.matmul %259, %6, %cst_56 {dimension_numbers = #tpu.dot_dimension_numbers<[1], [0], [0], [1], [0, 0, 1, 1], [], []>} : vector<8x32xbf16>, vector<32x32xbf16>, vector<8x32xf32> -> vector<8x32xf32>
    %261 = vector.broadcast %8 : vector<1x32xf32> to vector<8x32xf32>
    %262 = arith.addf %260, %261 : vector<8x32xf32>
    %cst_57 = arith.constant -1.000000e+00 : f32
    %cst_58 = arith.constant 1.000000e+00 : f32
    %263 = vector.broadcast %cst_57 : f32 to vector<8x32xf32>
    %264 = arith.maximumf %263, %262 : vector<8x32xf32>
    %265 = vector.broadcast %cst_58 : f32 to vector<8x32xf32>
    %266 = arith.minimumf %265, %264 : vector<8x32xf32>
    %267 = tpu.concatenate %253, %266 in 1 : vector<8x32xf32>, vector<8x32xf32> -> vector<8x64xf32>
    %268 = arith.truncf %267 : vector<8x64xf32> to vector<8x64xbf16>
    %cst_59 = arith.constant dense<0.000000e+00> : vector<8x128xf32>
    %269 = tpu.matmul %268, %9, %cst_59 {dimension_numbers = #tpu.dot_dimension_numbers<[1], [0], [0], [1], [0, 0, 1, 1], [], []>} : vector<8x64xbf16>, vector<64x128xbf16>, vector<8x128xf32> -> vector<8x128xf32>
    %270 = vector.broadcast %11 : vector<1x128xf32> to vector<8x128xf32>
    %271 = arith.addf %269, %270 : vector<8x128xf32>
    %c0_60 = arith.constant 0 : index
    %c0_61 = arith.constant 0 : index
    %272 = vector.load %arg2[%c0_60, %c0_61] : memref<8x128xf32, #tpu.memory_space<vmem>>, vector<8x128xf32>
    tpu.vector_store %arg2[%c0_60, %c0_61], %271 {strides = array<i32>} : memref<8x128xf32, #tpu.memory_space<vmem>>, vector<8x128xf32>,
    return
  }
}

</mosaic_0001>

<llo_original>
// kernel: forward.1
$region0: #{forward.1}
  #allocation0 [shape = 'u32[]', space=smem, size = 0x4, offset = 0x4, fixed_abs, tag = 'smem constant byte address 0x4 - core index']
  #allocation1 [shape = 'u32[144,128]{1,0:T(1,128)}', space=vmem, size = 0x12000, scoped, tag = 'internal scratch']
  #allocation2 [shape = 'f32[64,128]{1,0:T(8,128)}', space=vmem, size = 0x8000, scoped, tag = 'scratch operand']
  %s0 = inlined_call_operand.vmem [shape: s32[144,1], index: 0, kind: input, shape index: {}]
  %s1 = inlined_call_operand.vmem [shape: bf16[272,128], index: 1, kind: input, shape index: {}]
  %s2 = inlined_call_operand.vmem [shape: f32[8,128], index: 2, kind: output, shape index: {}]
  %s3 = sld [smem:[#allocation0]]
  $region18: #{forward.1} parent=0
    _
  %s5 = ssub.s32 1, %s3
  %s6 = scalar_select 0, %s5, %s3
  // Predicated region
  $region2: #{forward.1} parent=0 // pred_check
    _
  $region3: #{forward.1} parent=0 // pred_check_branch
    %8 = sbr.rel (0) target = $region5
  $region4: #{forward.1} parent=0 // pred_region
    _
  $region5: #{forward.1} parent=0 // pred_fallthru
    _
  // Predicated region
  $region6: #{forward.1} parent=0 // pred_check
    _
  $region7: #{forward.1} parent=0 // pred_check_branch
    %10 = sbr.rel (0) target = $region9
  $region8: #{forward.1} parent=0 // pred_region
    _
  $region9: #{forward.1} parent=0 // pred_fallthru
    _
  %v12 = vld [vmem:[%s1] sm:$0xf]
  %v13 = vld [vmem:[%s1 + $0x4] sm:$0xf]
  %v14 = vld [vmem:[%s1 + $0x8] sm:$0xf]
  %v15 = vld [vmem:[%s1 + $0xc] sm:$0xf]
  %v16 = vld [vmem:[%s1 + $0x10] sm:$0xf]
  %v17 = vld [vmem:[%s1 + $0x14] sm:$0xf]
  %v18 = vld [vmem:[%s1 + $0x18] sm:$0xf]
  %v19 = vld [vmem:[%s1 + $0x1c] sm:$0xf]
  %v20 = vld [vmem:[%s1 + $0x20] sm:$0xf]
  %v21 = vld [vmem:[%s1 + $0x24] sm:$0xf]
  %v22 = vld [vmem:[%s1 + $0x28] sm:$0xf]
  %v23 = vld [vmem:[%s1 + $0x2c] sm:$0xf]
  %v24 = vld [vmem:[%s1 + $0x30] sm:$0xf]
  %v25 = vld [vmem:[%s1 + $0x34] sm:$0xf]
  %v26 = vld [vmem:[%s1 + $0x38] sm:$0xf]
  %v27 = vld [vmem:[%s1 + $0x3c] sm:$0xf]
  %v28 = vld [vmem:[%s1 + $0x40] sm:$0x1]
  %v29 = vunpack.c.l.bf16 %v28
  %v30 = vld [vmem:[%s1 + $0x48] sm:$0xf]
  %v31 = vld [vmem:[%s1 + $0x4c] sm:$0xf]
  %v32 = vld [vmem:[%s1 + $0x50] sm:$0xf]
  %v33 = vld [vmem:[%s1 + $0x54] sm:$0xf]
  %v34 = vld [vmem:[%s1 + $0x58] sm:$0x1]
  %v35 = vunpack.c.l.bf16 %v34
  %v36 = vld [vmem:[%s1 + $0x60] sm:$0xf]
  %v37 = vld [vmem:[%s1 + $0x64] sm:$0xf]
  %v38 = vld [vmem:[%s1 + $0x68] sm:$0xf]
  %v39 = vld [vmem:[%s1 + $0x6c] sm:$0xf]
  %v40 = vld [vmem:[%s1 + $0x70] sm:$0xf]
  %v41 = vld [vmem:[%s1 + $0x74] sm:$0xf]
  %v42 = vld [vmem:[%s1 + $0x78] sm:$0xf]
  %v43 = vld [vmem:[%s1 + $0x7c] sm:$0xf]
  %v44 = vld [vmem:[%s1 + $0x80] sm:$0x1]
  %v45 = vunpack.c.l.bf16 %v44
  %v46 = vld [vmem:[%s0] sm:$0xff]
  %v47 = vld [vmem:[%s0 + $0x8] sm:$0xff]
  %v48 = vld [vmem:[%s0 + $0x10] sm:$0xff]
  %v49 = vld [vmem:[%s0 + $0x18] sm:$0xff]
  %v50 = vld [vmem:[%s0 + $0x20] sm:$0xff]
  %v51 = vld [vmem:[%s0 + $0x28] sm:$0xff]
  %v52 = vld [vmem:[%s0 + $0x30] sm:$0xff]
  %v53 = vld [vmem:[%s0 + $0x38] sm:$0xff]
  %v54 = vld [vmem:[%s0 + $0x40] sm:$0xff]
  %v55 = vld [vmem:[%s0 + $0x48] sm:$0xff]
  %v56 = vld [vmem:[%s0 + $0x50] sm:$0xff]
  %v57 = vld [vmem:[%s0 + $0x58] sm:$0xff]
  %v58 = vld [vmem:[%s0 + $0x60] sm:$0xff]
  %v59 = vld [vmem:[%s0 + $0x68] sm:$0xff]
  %v60 = vld [vmem:[%s0 + $0x70] sm:$0xff]
  %v61 = vld [vmem:[%s0 + $0x78] sm:$0xff]
  %v62 = vld [vmem:[%s0 + $0x80] sm:$0xff]
  %v63 = vld [vmem:[%s0 + $0x88] sm:$0xff]
  %v64 = vlaneseq
  %v65 = vand.u32 %v64, 127
  %66 = vset.pattern.permute.xlu0 0
  %67 = vperm.xlu0 %66, %v46
  %v68 = vpop.permute.xlu0 %67
  %69 = vset.pattern.permute.xlu0 0
  %70 = vperm.xlu0 %69, %v47
  %v71 = vpop.permute.xlu0 %70
  %72 = vset.pattern.permute.xlu0 0
  %73 = vperm.xlu0 %72, %v48
  %v74 = vpop.permute.xlu0 %73
  %75 = vset.pattern.permute.xlu0 0
  %76 = vperm.xlu0 %75, %v49
  %v77 = vpop.permute.xlu0 %76
  %78 = vset.pattern.permute.xlu0 0
  %79 = vperm.xlu0 %78, %v50
  %v80 = vpop.permute.xlu0 %79
  %81 = vset.pattern.permute.xlu0 0
  %82 = vperm.xlu0 %81, %v51
  %v83 = vpop.permute.xlu0 %82
  %84 = vset.pattern.permute.xlu0 0
  %85 = vperm.xlu0 %84, %v52
  %v86 = vpop.permute.xlu0 %85
  %87 = vset.pattern.permute.xlu0 0
  %88 = vperm.xlu0 %87, %v53
  %v89 = vpop.permute.xlu0 %88
  %90 = vset.pattern.permute.xlu0 0
  %91 = vperm.xlu0 %90, %v54
  %v92 = vpop.permute.xlu0 %91
  %93 = vset.pattern.permute.xlu0 0
  %94 = vperm.xlu0 %93, %v55
  %v95 = vpop.permute.xlu0 %94
  %96 = vset.pattern.permute.xlu0 0
  %97 = vperm.xlu0 %96, %v56
  %v98 = vpop.permute.xlu0 %97
  %99 = vset.pattern.permute.xlu0 0
  %100 = vperm.xlu0 %99, %v57
  %v101 = vpop.permute.xlu0 %100
  %102 = vset.pattern.permute.xlu0 0
  %103 = vperm.xlu0 %102, %v58
  %v104 = vpop.permute.xlu0 %103
  %105 = vset.pattern.permute.xlu0 0
  %106 = vperm.xlu0 %105, %v59
  %v107 = vpop.permute.xlu0 %106
  %108 = vset.pattern.permute.xlu0 0
  %109 = vperm.xlu0 %108, %v60
  %v110 = vpop.permute.xlu0 %109
  %111 = vset.pattern.permute.xlu0 0
  %112 = vperm.xlu0 %111, %v61
  %v113 = vpop.permute.xlu0 %112
  %114 = vset.pattern.permute.xlu0 0
  %115 = vperm.xlu0 %114, %v62
  %v116 = vpop.permute.xlu0 %115
  %vm117 = vcmp.eq.s32.totalorder %v65, %v68
  %vm118 = vcmp.eq.s32.totalorder %v65, %v71
  %vm119 = vcmp.eq.s32.totalorder %v65, %v74
  %vm120 = vcmp.eq.s32.totalorder %v65, %v77
  %vm121 = vcmp.eq.s32.totalorder %v65, %v80
  %vm122 = vcmp.eq.s32.totalorder %v65, %v83
  %vm123 = vcmp.eq.s32.totalorder %v65, %v86
  %vm124 = vcmp.eq.s32.totalorder %v65, %v89
  %vm125 = vcmp.eq.s32.totalorder %v65, %v92
  %vm126 = vcmp.eq.s32.totalorder %v65, %v95
  %vm127 = vcmp.eq.s32.totalorder %v65, %v98
  %vm128 = vcmp.eq.s32.totalorder %v65, %v101
  %vm129 = vcmp.eq.s32.totalorder %v65, %v104
  %vm130 = vcmp.eq.s32.totalorder %v65, %v107
  %vm131 = vcmp.eq.s32.totalorder %v65, %v110
  %vm132 = vcmp.eq.s32.totalorder %v65, %v113
  %vm133 = vcmp.eq.s32.totalorder %v65, %v116
  %v134 = vsel %vm117, 1, 0
  %v135 = vsel %vm118, 1, 0
  %v136 = vsel %vm119, 1, 0
  %v137 = vsel %vm120, 1, 0
  %v138 = vsel %vm121, 1, 0
  %v139 = vsel %vm122, 1, 0
  %v140 = vsel %vm123, 1, 0
  %v141 = vsel %vm124, 1, 0
  %v142 = vsel %vm125, 1, 0
  %v143 = vsel %vm126, 1, 0
  %v144 = vsel %vm127, 1, 0
  %v145 = vsel %vm128, 1, 0
  %v146 = vsel %vm129, 1, 0
  %v147 = vsel %vm130, 1, 0
  %v148 = vsel %vm131, 1, 0
  %v149 = vsel %vm132, 1, 0
  %v150 = vsel %vm133, 1, 0
  %v151 = vcvt.s32.f32 %v134
  %v152 = vcvt.s32.f32 %v135
  %v153 = vcvt.s32.f32 %v136
  %v154 = vcvt.s32.f32 %v137
  %v155 = vcvt.s32.f32 %v138
  %v156 = vcvt.s32.f32 %v139
  %v157 = vcvt.s32.f32 %v140
  %v158 = vcvt.s32.f32 %v141
  %v159 = vcvt.s32.f32 %v142
  %v160 = vcvt.s32.f32 %v143
  %v161 = vcvt.s32.f32 %v144
  %v162 = vcvt.s32.f32 %v145
  %v163 = vcvt.s32.f32 %v146
  %v164 = vcvt.s32.f32 %v147
  %v165 = vcvt.s32.f32 %v148
  %v166 = vcvt.s32.f32 %v149
  %v167 = vcvt.s32.f32 %v150
  %v168 = vpack.c.bf16 %v152, %v151
  %v169 = vpack.c.bf16 %v154, %v153
  %v170 = vpack.c.bf16 %v156, %v155
  %v171 = vpack.c.bf16 %v158, %v157
  %v172 = vpack.c.bf16 %v160, %v159
  %v173 = vpack.c.bf16 %v162, %v161
  %v174 = vpack.c.bf16 %v164, %v163
  %v175 = vpack.c.bf16 %v166, %v165
  %v176 = vpack.c.bf16 %v167, %v167
  %v181 = vunpack.c.l.b16 %v12
  %v182 = vunpack.c.l.b16 %v13
  %v183 = vunpack.c.l.b16 %v14
  %v184 = vunpack.c.l.b16 %v15
  %v185 = vpack.c.b16 %v182, %v181
  %v186 = vpack.c.b16 %v184, %v183
  %vm189 = vcmask 261120
  %v191 = vsel %vm189, %v168, 0
  %v194 = vsel %vm189, %v169, 0
  %v197 = vsel %vm189, %v170, 0
  %v200 = vsel %vm189, %v171, 0
  %v203 = vsel %vm189, %v172, 0
  %v206 = vsel %vm189, %v173, 0
  %v209 = vsel %vm189, %v174, 0
  %v212 = vsel %vm189, %v175, 0
  %v215 = vsel %vm189, %v176, 0
  %217 = vmatprep.subr.bf16.mxu0 0
  %218 = vmatpush1.bf16.msra.mxu0 0
  %219 = vmatprep.subr.bf16.mxu0 0
  %220 = vmatpush1.bf16.msra.mxu0 0
  %221 = vmatprep.subr.bf16.mxu0 0
  %222 = vmatpush1.bf16.msra.mxu0 0
  %223 = vmatprep.subr.bf16.mxu0 0
  %224 = vmatpush1.bf16.msra.mxu0 0
  %225 = vmatprep.subr.bf16.mxu0 0
  %226 = vmatpush1.bf16.msra.mxu0 0
  %227 = vmatprep.subr.bf16.mxu0 0
  %228 = vmatpush1.bf16.msra.mxu0 0
  %229 = vmatprep.subr.bf16.mxu0 0
  %230 = vmatpush1.bf16.msra.mxu0 %v186
  %231 = vmatprep.subr.bf16.mxu0 0
  %232 = vmatpush1.bf16.msra.mxu0 %v185
  %233 = vmatprep.subr.bf16.mxu0 0
  %234 = vmatpush2.bf16.msra.mxu0 0
  %235 = vmatprep.subr.bf16.mxu0 0
  %236 = vmatpush2.bf16.msra.mxu0 0
  %237 = vmatprep.subr.bf16.mxu0 0
  %238 = vmatpush2.bf16.msra.mxu0 0
  %239 = vmatprep.subr.bf16.mxu0 0
  %240 = vmatpush2.bf16.msra.mxu0 0
  %241 = vmatprep.subr.bf16.mxu0 0
  %242 = vmatpush2.bf16.msra.mxu0 0
  %243 = vmatprep.subr.bf16.mxu0 0
  %244 = vmatpush2.bf16.msra.mxu0 0
  %245 = vmatprep.subr.bf16.mxu0 0
  %246 = vmatpush2.bf16.msra.mxu0 0
  %247 = vmatprep.subr.bf16.mxu0 0
  %248 = vmatpush2.bf16.msra.mxu0 0
  %249 = vmatprep.mubr.bf16.mxu0 0
  %250 = vmatmul.mubr.bf16.gmra.mxu0 %v191
  %v251 = vpop.f32.mrf.mxu0
  %v252 = vadd.f32 0.0, %v251
  %v253 = vpop.f32.mrf.mxu0
  %v254 = vpop.f32.mrf.mxu0
  %v255 = vadd.f32 0.0, %v254
  %v256 = vpop.f32.mrf.mxu0
  %257 = vmatprep.mubr.bf16.mxu0 0
  %258 = vmatmul.mubr.bf16.gmra.mxu0 %v194
  %v259 = vpop.f32.mrf.mxu0
  %v260 = vadd.f32 0.0, %v259
  %v261 = vpop.f32.mrf.mxu0
  %v262 = vpop.f32.mrf.mxu0
  %v263 = vadd.f32 0.0, %v262
  %v264 = vpop.f32.mrf.mxu0
  %265 = vmatprep.mubr.bf16.mxu0 0
  %266 = vmatmul.mubr.bf16.gmra.mxu0 %v197
  %v267 = vpop.f32.mrf.mxu0
  %v268 = vadd.f32 0.0, %v267
  %v269 = vpop.f32.mrf.mxu0
  %v270 = vpop.f32.mrf.mxu0
  %v271 = vadd.f32 0.0, %v270
  %v272 = vpop.f32.mrf.mxu0
  %273 = vmatprep.mubr.bf16.mxu0 0
  %274 = vmatmul.mubr.bf16.gmra.mxu0 %v200
  %v275 = vpop.f32.mrf.mxu0
  %v276 = vadd.f32 0.0, %v275
  %v277 = vpop.f32.mrf.mxu0
  %v278 = vpop.f32.mrf.mxu0
  %v279 = vadd.f32 0.0, %v278
  %v280 = vpop.f32.mrf.mxu0
  %281 = vmatprep.mubr.bf16.mxu0 0
  %282 = vmatmul.mubr.bf16.gmra.mxu0 %v203
  %v283 = vpop.f32.mrf.mxu0
  %v284 = vadd.f32 0.0, %v283
  %v285 = vpop.f32.mrf.mxu0
  %v286 = vpop.f32.mrf.mxu0
  %v287 = vadd.f32 0.0, %v286
  %v288 = vpop.f32.mrf.mxu0
  %289 = vmatprep.mubr.bf16.mxu0 0
  %290 = vmatmul.mubr.bf16.gmra.mxu0 %v206
  %v291 = vpop.f32.mrf.mxu0
  %v292 = vadd.f32 0.0, %v291
  %v293 = vpop.f32.mrf.mxu0
  %v294 = vpop.f32.mrf.mxu0
  %v295 = vadd.f32 0.0, %v294
  %v296 = vpop.f32.mrf.mxu0
  %297 = vmatprep.mubr.bf16.mxu0 0
  %298 = vmatmul.mubr.bf16.gmra.mxu0 %v209
  %v299 = vpop.f32.mrf.mxu0
  %v300 = vadd.f32 0.0, %v299
  %v301 = vpop.f32.mrf.mxu0
  %v302 = vpop.f32.mrf.mxu0
  %v303 = vadd.f32 0.0, %v302
  %v304 = vpop.f32.mrf.mxu0
  %305 = vmatprep.mubr.bf16.mxu0 0
  %306 = vmatmul.mubr.bf16.gmra.mxu0 %v212
  %v307 = vpop.f32.mrf.mxu0
  %v308 = vadd.f32 0.0, %v307
  %v309 = vpop.f32.mrf.mxu0
  %v310 = vpop.f32.mrf.mxu0
  %v311 = vadd.f32 0.0, %v310
  %v312 = vpop.f32.mrf.mxu0
  %313 = vmatprep.mubr.bf16.mxu0 0
  %314 = vmatmul.mubr.bf16.gmra.mxu0 %v215
  %v315 = vpop.f32.mrf.mxu0
  %v316 = vadd.f32 0.0, %v315
  %v317 = vpop.f32.mrf.mxu0
  %v318 = vpop.f32.mrf.mxu0
  %v319 = vpop.f32.mrf.mxu0
  %320 = vdwg.mxu0
  %v321 = vpack.c.bf16 %v255, %v252
  %v322 = vpack.c.bf16 %v263, %v260
  %v323 = vpack.c.bf16 %v271, %v268
  %v324 = vpack.c.bf16 %v279, %v276
  %v325 = vpack.c.bf16 %v287, %v284
  %v326 = vpack.c.bf16 %v295, %v292
  %v327 = vpack.c.bf16 %v303, %v300
  %v328 = vpack.c.bf16 %v311, %v308
  %v333 = vunpack.c.l.b16 %v20
  %v334 = vunpack.c.l.b16 %v21
  %v335 = vunpack.c.l.b16 %v22
  %v336 = vunpack.c.l.b16 %v23
  %v337 = vpack.c.b16 %v334, %v333
  %v338 = vpack.c.b16 %v336, %v335
  %v342 = vsel %vm189, %v325, 0
  %v345 = vsel %vm189, %v326, 0
  %v348 = vsel %vm189, %v327, 0
  %v351 = vsel %vm189, %v328, 0
  %353 = vmatprep.subr.bf16.mxu0 0
  %354 = vmatpush1.bf16.msra.mxu0 0
  %355 = vmatprep.subr.bf16.mxu0 0
  %356 = vmatpush1.bf16.msra.mxu0 0
  %357 = vmatprep.subr.bf16.mxu0 0
  %358 = vmatpush1.bf16.msra.mxu0 0
  %359 = vmatprep.subr.bf16.mxu0 0
  %360 = vmatpush1.bf16.msra.mxu0 0
  %361 = vmatprep.subr.bf16.mxu0 0
  %362 = vmatpush1.bf16.msra.mxu0 0
  %363 = vmatprep.subr.bf16.mxu0 0
  %364 = vmatpush1.bf16.msra.mxu0 0
  %365 = vmatprep.subr.bf16.mxu0 0
  %366 = vmatpush1.bf16.msra.mxu0 %v338
  %367 = vmatprep.subr.bf16.mxu0 0
  %368 = vmatpush1.bf16.msra.mxu0 %v337
  %369 = vmatprep.subr.bf16.mxu0 0
  %370 = vmatpush2.bf16.msra.mxu0 0
  %371 = vmatprep.subr.bf16.mxu0 0
  %372 = vmatpush2.bf16.msra.mxu0 0
  %373 = vmatprep.subr.bf16.mxu0 0
  %374 = vmatpush2.bf16.msra.mxu0 0
  %375 = vmatprep.subr.bf16.mxu0 0
  %376 = vmatpush2.bf16.msra.mxu0 0
  %377 = vmatprep.subr.bf16.mxu0 0
  %378 = vmatpush2.bf16.msra.mxu0 0
  %379 = vmatprep.subr.bf16.mxu0 0
  %380 = vmatpush2.bf16.msra.mxu0 0
  %381 = vmatprep.subr.bf16.mxu0 0
  %382 = vmatpush2.bf16.msra.mxu0 0
  %383 = vmatprep.subr.bf16.mxu0 0
  %384 = vmatpush2.bf16.msra.mxu0 0
  %385 = vmatprep.mubr.bf16.mxu0 0
  %386 = vmatmul.mubr.bf16.gmra.mxu0 %v342
  %v387 = vpop.f32.mrf.mxu0
  %v388 = vadd.f32 0.0, %v387
  %v389 = vpop.f32.mrf.mxu0
  %v390 = vpop.f32.mrf.mxu0
  %v391 = vadd.f32 0.0, %v390
  %v392 = vpop.f32.mrf.mxu0
  %393 = vmatprep.mubr.bf16.mxu0 0
  %394 = vmatmul.mubr.bf16.gmra.mxu0 %v345
  %v395 = vpop.f32.mrf.mxu0
  %v396 = vadd.f32 0.0, %v395
  %v397 = vpop.f32.mrf.mxu0
  %v398 = vpop.f32.mrf.mxu0
  %v399 = vadd.f32 0.0, %v398
  %v400 = vpop.f32.mrf.mxu0
  %401 = vmatprep.mubr.bf16.mxu0 0
  %402 = vmatmul.mubr.bf16.gmra.mxu0 %v348
  %v403 = vpop.f32.mrf.mxu0
  %v404 = vadd.f32 0.0, %v403
  %v405 = vpop.f32.mrf.mxu0
  %v406 = vpop.f32.mrf.mxu0
  %v407 = vadd.f32 0.0, %v406
  %v408 = vpop.f32.mrf.mxu0
  %409 = vmatprep.mubr.bf16.mxu0 0
  %410 = vmatmul.mubr.bf16.gmra.mxu0 %v351
  %v411 = vpop.f32.mrf.mxu0
  %v412 = vadd.f32 0.0, %v411
  %v413 = vpop.f32.mrf.mxu0
  %v414 = vpop.f32.mrf.mxu0
  %v415 = vadd.f32 0.0, %v414
  %v416 = vpop.f32.mrf.mxu0
  %417 = vdwg.mxu0
  %v422 = vunpack.c.l.b16 %v16
  %v423 = vunpack.c.l.b16 %v17
  %v424 = vunpack.c.l.b16 %v18
  %v425 = vunpack.c.l.b16 %v19
  %v426 = vpack.c.b16 %v423, %v422
  %v427 = vpack.c.b16 %v425, %v424
  %v431 = vsel %vm189, %v321, 0
  %v434 = vsel %vm189, %v322, 0
  %v437 = vsel %vm189, %v323, 0
  %v440 = vsel %vm189, %v324, 0
  %442 = vmatprep.subr.bf16.mxu0 0
  %443 = vmatpush1.bf16.msra.mxu0 0
  %444 = vmatprep.subr.bf16.mxu0 0
  %445 = vmatpush1.bf16.msra.mxu0 0
  %446 = vmatprep.subr.bf16.mxu0 0
  %447 = vmatpush1.bf16.msra.mxu0 0
  %448 = vmatprep.subr.bf16.mxu0 0
  %449 = vmatpush1.bf16.msra.mxu0 0
  %450 = vmatprep.subr.bf16.mxu0 0
  %451 = vmatpush1.bf16.msra.mxu0 0
  %452 = vmatprep.subr.bf16.mxu0 0
  %453 = vmatpush1.bf16.msra.mxu0 0
  %454 = vmatprep.subr.bf16.mxu0 0
  %455 = vmatpush1.bf16.msra.mxu0 %v427
  %456 = vmatprep.subr.bf16.mxu0 0
  %457 = vmatpush1.bf16.msra.mxu0 %v426
  %458 = vmatprep.subr.bf16.mxu0 0
  %459 = vmatpush2.bf16.msra.mxu0 0
  %460 = vmatprep.subr.bf16.mxu0 0
  %461 = vmatpush2.bf16.msra.mxu0 0
  %462 = vmatprep.subr.bf16.mxu0 0
  %463 = vmatpush2.bf16.msra.mxu0 0
  %464 = vmatprep.subr.bf16.mxu0 0
  %465 = vmatpush2.bf16.msra.mxu0 0
  %466 = vmatprep.subr.bf16.mxu0 0
  %467 = vmatpush2.bf16.msra.mxu0 0
  %468 = vmatprep.subr.bf16.mxu0 0
  %469 = vmatpush2.bf16.msra.mxu0 0
  %470 = vmatprep.subr.bf16.mxu0 0
  %471 = vmatpush2.bf16.msra.mxu0 0
  %472 = vmatprep.subr.bf16.mxu0 0
  %473 = vmatpush2.bf16.msra.mxu0 0
  %474 = vmatprep.mubr.bf16.mxu0 0
  %475 = vmatmul.mubr.bf16.gmra.mxu0 %v431
  %v476 = vpop.f32.mrf.mxu0
  %v477 = vadd.f32 %v388, %v476
  %v478 = vpop.f32.mrf.mxu0
  %v479 = vpop.f32.mrf.mxu0
  %v480 = vadd.f32 %v391, %v479
  %v481 = vpop.f32.mrf.mxu0
  %482 = vmatprep.mubr.bf16.mxu0 0
  %483 = vmatmul.mubr.bf16.gmra.mxu0 %v434
  %v484 = vpop.f32.mrf.mxu0
  %v485 = vadd.f32 %v396, %v484
  %v486 = vpop.f32.mrf.mxu0
  %v487 = vpop.f32.mrf.mxu0
  %v488 = vadd.f32 %v399, %v487
  %v489 = vpop.f32.mrf.mxu0
  %490 = vmatprep.mubr.bf16.mxu0 0
  %491 = vmatmul.mubr.bf16.gmra.mxu0 %v437
  %v492 = vpop.f32.mrf.mxu0
  %v493 = vadd.f32 %v404, %v492
  %v494 = vpop.f32.mrf.mxu0
  %v495 = vpop.f32.mrf.mxu0
  %v496 = vadd.f32 %v407, %v495
  %v497 = vpop.f32.mrf.mxu0
  %498 = vmatprep.mubr.bf16.mxu0 0
  %499 = vmatmul.mubr.bf16.gmra.mxu0 %v440
  %v500 = vpop.f32.mrf.mxu0
  %v501 = vadd.f32 %v412, %v500
  %v502 = vpop.f32.mrf.mxu0
  %v503 = vpop.f32.mrf.mxu0
  %v504 = vadd.f32 %v415, %v503
  %v505 = vpop.f32.mrf.mxu0
  %506 = vdwg.mxu0
  %v507 = vlaneseq
  %v508 = vshrl.u32 %v507, 7
  %v509 = vsub.s32 0, %v508
  %v510 = vrot.slane %v29, %v509
  %v511 = vadd.f32 %v477, %v510
  %v512 = vadd.f32 %v480, %v510
  %v513 = vadd.f32 %v485, %v510
  %v514 = vadd.f32 %v488, %v510
  %v515 = vadd.f32 %v493, %v510
  %v516 = vadd.f32 %v496, %v510
  %v517 = vadd.f32 %v501, %v510
  %v518 = vadd.f32 %v504, %v510
  %519 = vst [vmem:[#allocation2] sm:$0xff] %v511
  %520 = vst [vmem:[#allocation2 + $0x8] sm:$0xff] %v512
  %521 = vst [vmem:[#allocation2 + $0x10] sm:$0xff] %v513
  %522 = vst [vmem:[#allocation2 + $0x18] sm:$0xff] %v514
  %523 = vst [vmem:[#allocation2 + $0x20] sm:$0xff] %v515
  %524 = vst [vmem:[#allocation2 + $0x28] sm:$0xff] %v516
  %525 = vst [vmem:[#allocation2 + $0x30] sm:$0xff] %v517
  %526 = vst [vmem:[#allocation2 + $0x38] sm:$0xff] %v518
  %vm527 = vcmp.lt.s32.totalorder %v65, 16
  %v528 = vsel %vm527, 0, 7
  %529 = vset.pattern.permute.xlu0 0
  %530 = vperm.xlu0 %529, %v63
  %v531 = vpop.permute.xlu0 %530
  %vm532 = vcmp.lt.s32.totalorder %v528, %v531
  %v533 = vsel %vm527, 1, 6
  %vm534 = vcmp.lt.s32.totalorder %v533, %v531
  %v535 = vsel %vm527, 2, 5
  %vm536 = vcmp.lt.s32.totalorder %v535, %v531
  %v537 = vsel %vm527, 3, 4
  %vm538 = vcmp.lt.s32.totalorder %v537, %v531
  %v539 = vsel %vm527, 4, 3
  %vm540 = vcmp.lt.s32.totalorder %v539, %v531
  %v541 = vsel %vm527, 5, 2
  %vm542 = vcmp.lt.s32.totalorder %v541, %v531
  %v543 = vsel %vm527, 6, 1
  %vm544 = vcmp.lt.s32.totalorder %v543, %v531
  %v545 = vsel %vm527, 7, 0
  %vm546 = vcmp.lt.s32.totalorder %v545, %v531
  %v547 = vld [vmem:[#allocation2] sm:$0xff]
  %v552 = vunpack.c.l.b16 %v24
  %v553 = vunpack.c.l.b16 %v25
  %v554 = vunpack.c.l.b16 %v26
  %v555 = vunpack.c.l.b16 %v27
  %v556 = vpack.c.b16 %v553, %v552
  %v557 = vpack.c.b16 %v555, %v554
  %v561 = vsel %vm189, 0, 0
  %563 = vmatprep.subr.bf16.mxu0 0
  %564 = vmatpush1.bf16.msra.mxu0 0
  %565 = vmatprep.subr.bf16.mxu0 0
  %566 = vmatpush1.bf16.msra.mxu0 0
  %567 = vmatprep.subr.bf16.mxu0 0
  %568 = vmatpush1.bf16.msra.mxu0 0
  %569 = vmatprep.subr.bf16.mxu0 0
  %570 = vmatpush1.bf16.msra.mxu0 0
  %571 = vmatprep.subr.bf16.mxu0 0
  %572 = vmatpush1.bf16.msra.mxu0 0
  %573 = vmatprep.subr.bf16.mxu0 0
  %574 = vmatpush1.bf16.msra.mxu0 0
  %575 = vmatprep.subr.bf16.mxu0 0
  %576 = vmatpush1.bf16.msra.mxu0 %v557
  %577 = vmatprep.subr.bf16.mxu0 0
  %578 = vmatpush1.bf16.msra.mxu0 %v556
  %579 = vmatprep.subr.bf16.mxu0 0
  %580 = vmatpush2.bf16.msra.mxu0 0
  %581 = vmatprep.subr.bf16.mxu0 0
  %582 = vmatpush2.bf16.msra.mxu0 0
  %583 = vmatprep.subr.bf16.mxu0 0
  %584 = vmatpush2.bf16.msra.mxu0 0
  %585 = vmatprep.subr.bf16.mxu0 0
  %586 = vmatpush2.bf16.msra.mxu0 0
  %587 = vmatprep.subr.bf16.mxu0 0
  %588 = vmatpush2.bf16.msra.mxu0 0
  %589 = vmatprep.subr.bf16.mxu0 0
  %590 = vmatpush2.bf16.msra.mxu0 0
  %591 = vmatprep.subr.bf16.mxu0 0
  %592 = vmatpush2.bf16.msra.mxu0 0
  %593 = vmatprep.subr.bf16.mxu0 0
  %594 = vmatpush2.bf16.msra.mxu0 0
  %595 = vmatprep.mubr.bf16.mxu0 0
  %596 = vmatmul.mubr.bf16.gmra.mxu0 %v561
  %v597 = vpop.f32.mrf.mxu0
  %v598 = vadd.f32 0.0, %v597
  %v599 = vpop.f32.mrf.mxu0
  %v600 = vpop.f32.mrf.mxu0
  %v601 = vpop.f32.mrf.mxu0
  %602 = vdwg.mxu0
  %v603 = vadd.f32 %v547, %v598
  %v604 = vxor.u32 %v603, 2147483648
  %v605 = vmul.f32 %v604, 1.442695
  %v606 = vpow.pop %v605
  %v607 = vadd.f32 %v606, 1.0
  %v608 = vrcp.pop %v607
  %v609 = vmul.f32 1.0, %v608
  %v610 = vtanh.pop %v603
  %v611 = vmul.f32 %v609, 0.0
  %613 = vrot.lane.b32.xlu0 %v610, 32
  %v614 = vpop.permute.xlu0 %613
  %v616 = vmul.f32 %v609, %v614
  %618 = vrot.lane.b32.xlu0 %v616, 32
  %v619 = vpop.permute.xlu0 %618
  %v621 = vadd.f32 %v611, %v619
  %v622 = vtanh.pop %v621
  %624 = vrot.lane.b32.xlu0 %v622, 32
  %v625 = vpop.permute.xlu0 %624
  %v627 = vmul.f32 %v609, %v625
  %629 = vrot.lane.b32.xlu0 %v627, 64
  %v630 = vpop.permute.xlu0 %629
  %v632 = vsel %vm532, %v630, 0.0
  %634 = vrot.lane.b32.xlu0 %v621, 96
  %v635 = vpop.permute.xlu0 %634
  %v637 = vsel %vm532, %v635, 0.0
  %v638 = vld [vmem:[#allocation2 + $0x8] sm:$0xff]
  %v639 = vpack.c.bf16 %v632, %v632
  %v641 = vsel %vm189, %v639, 0
  %643 = vmatprep.subr.bf16.mxu0 0
  %644 = vmatpush1.bf16.msra.mxu0 0
  %645 = vmatprep.subr.bf16.mxu0 0
  %646 = vmatpush1.bf16.msra.mxu0 0
  %647 = vmatprep.subr.bf16.mxu0 0
  %648 = vmatpush1.bf16.msra.mxu0 0
  %649 = vmatprep.subr.bf16.mxu0 0
  %650 = vmatpush1.bf16.msra.mxu0 0
  %651 = vmatprep.subr.bf16.mxu0 0
  %652 = vmatpush1.bf16.msra.mxu0 0
  %653 = vmatprep.subr.bf16.mxu0 0
  %654 = vmatpush1.bf16.msra.mxu0 0
  %655 = vmatprep.subr.bf16.mxu0 0
  %656 = vmatpush1.bf16.msra.mxu0 %v557
  %657 = vmatprep.subr.bf16.mxu0 0
  %658 = vmatpush1.bf16.msra.mxu0 %v556
  %659 = vmatprep.subr.bf16.mxu0 0
  %660 = vmatpush2.bf16.msra.mxu0 0
  %661 = vmatprep.subr.bf16.mxu0 0
  %662 = vmatpush2.bf16.msra.mxu0 0
  %663 = vmatprep.subr.bf16.mxu0 0
  %664 = vmatpush2.bf16.msra.mxu0 0
  %665 = vmatprep.subr.bf16.mxu0 0
  %666 = vmatpush2.bf16.msra.mxu0 0
  %667 = vmatprep.subr.bf16.mxu0 0
  %668 = vmatpush2.bf16.msra.mxu0 0
  %669 = vmatprep.subr.bf16.mxu0 0
  %670 = vmatpush2.bf16.msra.mxu0 0
  %671 = vmatprep.subr.bf16.mxu0 0
  %672 = vmatpush2.bf16.msra.mxu0 0
  %673 = vmatprep.subr.bf16.mxu0 0
  %674 = vmatpush2.bf16.msra.mxu0 0
  %675 = vmatprep.mubr.bf16.mxu0 0
  %676 = vmatmul.mubr.bf16.gmra.mxu0 %v641
  %v677 = vpop.f32.mrf.mxu0
  %v678 = vadd.f32 0.0, %v677
  %v679 = vpop.f32.mrf.mxu0
  %v680 = vpop.f32.mrf.mxu0
  %v681 = vpop.f32.mrf.mxu0
  %682 = vdwg.mxu0
  %v683 = vadd.f32 %v638, %v678
  %v684 = vxor.u32 %v683, 2147483648
  %v685 = vmul.f32 %v684, 1.442695
  %v686 = vpow.pop %v685
  %v687 = vadd.f32 %v686, 1.0
  %v688 = vrcp.pop %v687
  %v689 = vmul.f32 1.0, %v688
  %v690 = vtanh.pop %v683
  %692 = vrot.lane.b32.xlu0 %v637, 32
  %v693 = vpop.permute.xlu0 %692
  %v695 = vmul.f32 %v689, %v693
  %697 = vrot.lane.b32.xlu0 %v690, 32
  %v698 = vpop.permute.xlu0 %697
  %v700 = vmul.f32 %v689, %v698
  %702 = vrot.lane.b32.xlu0 %v700, 32
  %v703 = vpop.permute.xlu0 %702
  %v705 = vadd.f32 %v695, %v703
  %v706 = vtanh.pop %v705
  %708 = vrot.lane.b32.xlu0 %v706, 32
  %v709 = vpop.permute.xlu0 %708
  %v711 = vmul.f32 %v689, %v709
  %713 = vrot.lane.b32.xlu0 %v711, 64
  %v714 = vpop.permute.xlu0 %713
  %v716 = vsel %vm534, %v714, %v632
  %718 = vrot.lane.b32.xlu0 %v705, 96
  %v719 = vpop.permute.xlu0 %718
  %v721 = vsel %vm534, %v719, %v637
  %v722 = vld [vmem:[#allocation2 + $0x10] sm:$0xff]
  %v723 = vpack.c.bf16 %v716, %v716
  %v725 = vsel %vm189, %v723, 0
  %727 = vmatprep.subr.bf16.mxu0 0
  %728 = vmatpush1.bf16.msra.mxu0 0
  %729 = vmatprep.subr.bf16.mxu0 0
  %730 = vmatpush1.bf16.msra.mxu0 0
  %731 = vmatprep.subr.bf16.mxu0 0
  %732 = vmatpush1.bf16.msra.mxu0 0
  %733 = vmatprep.subr.bf16.mxu0 0
  %734 = vmatpush1.bf16.msra.mxu0 0
  %735 = vmatprep.subr.bf16.mxu0 0
  %736 = vmatpush1.bf16.msra.mxu0 0
  %737 = vmatprep.subr.bf16.mxu0 0
  %738 = vmatpush1.bf16.msra.mxu0 0
  %739 = vmatprep.subr.bf16.mxu0 0
  %740 = vmatpush1.bf16.msra.mxu0 %v557
  %741 = vmatprep.subr.bf16.mxu0 0
  %742 = vmatpush1.bf16.msra.mxu0 %v556
  %743 = vmatprep.subr.bf16.mxu0 0
  %744 = vmatpush2.bf16.msra.mxu0 0
  %745 = vmatprep.subr.bf16.mxu0 0
  %746 = vmatpush2.bf16.msra.mxu0 0
  %747 = vmatprep.subr.bf16.mxu0 0
  %748 = vmatpush2.bf16.msra.mxu0 0
  %749 = vmatprep.subr.bf16.mxu0 0
  %750 = vmatpush2.bf16.msra.mxu0 0
  %751 = vmatprep.subr.bf16.mxu0 0
  %752 = vmatpush2.bf16.msra.mxu0 0
  %753 = vmatprep.subr.bf16.mxu0 0
  %754 = vmatpush2.bf16.msra.mxu0 0
  %755 = vmatprep.subr.bf16.mxu0 0
  %756 = vmatpush2.bf16.msra.mxu0 0
  %757 = vmatprep.subr.bf16.mxu0 0
  %758 = vmatpush2.bf16.msra.mxu0 0
  %759 = vmatprep.mubr.bf16.mxu0 0
  %760 = vmatmul.mubr.bf16.gmra.mxu0 %v725
  %v761 = vpop.f32.mrf.mxu0
  %v762 = vadd.f32 0.0, %v761
  %v763 = vpop.f32.mrf.mxu0
  %v764 = vpop.f32.mrf.mxu0
  %v765 = vpop.f32.mrf.mxu0
  %766 = vdwg.mxu0
  %v767 = vadd.f32 %v722, %v762
  %v768 = vxor.u32 %v767, 2147483648
  %v769 = vmul.f32 %v768, 1.442695
  %v770 = vpow.pop %v769
  %v771 = vadd.f32 %v770, 1.0
  %v772 = vrcp.pop %v771
  %v773 = vmul.f32 1.0, %v772
  %v774 = vtanh.pop %v767
  %776 = vrot.lane.b32.xlu0 %v721, 32
  %v777 = vpop.permute.xlu0 %776
  %v779 = vmul.f32 %v773, %v777
  %781 = vrot.lane.b32.xlu0 %v774, 32
  %v782 = vpop.permute.xlu0 %781
  %v784 = vmul.f32 %v773, %v782
  %786 = vrot.lane.b32.xlu0 %v784, 32
  %v787 = vpop.permute.xlu0 %786
  %v789 = vadd.f32 %v779, %v787
  %v790 = vtanh.pop %v789
  %792 = vrot.lane.b32.xlu0 %v790, 32
  %v793 = vpop.permute.xlu0 %792
  %v795 = vmul.f32 %v773, %v793
  %797 = vrot.lane.b32.xlu0 %v795, 64
  %v798 = vpop.permute.xlu0 %797
  %v800 = vsel %vm536, %v798, %v716
  %802 = vrot.lane.b32.xlu0 %v789, 96
  %v803 = vpop.permute.xlu0 %802
  %v805 = vsel %vm536, %v803, %v721
  %v806 = vld [vmem:[#allocation2 + $0x18] sm:$0xff]
  %v807 = vpack.c.bf16 %v800, %v800
  %v809 = vsel %vm189, %v807, 0
  %811 = vmatprep.subr.bf16.mxu0 0
  %812 = vmatpush1.bf16.msra.mxu0 0
  %813 = vmatprep.subr.bf16.mxu0 0
  %814 = vmatpush1.bf16.msra.mxu0 0
  %815 = vmatprep.subr.bf16.mxu0 0
  %816 = vmatpush1.bf16.msra.mxu0 0
  %817 = vmatprep.subr.bf16.mxu0 0
  %818 = vmatpush1.bf16.msra.mxu0 0
  %819 = vmatprep.subr.bf16.mxu0 0
  %820 = vmatpush1.bf16.msra.mxu0 0
  %821 = vmatprep.subr.bf16.mxu0 0
  %822 = vmatpush1.bf16.msra.mxu0 0
  %823 = vmatprep.subr.bf16.mxu0 0
  %824 = vmatpush1.bf16.msra.mxu0 %v557
  %825 = vmatprep.subr.bf16.mxu0 0
  %826 = vmatpush1.bf16.msra.mxu0 %v556
  %827 = vmatprep.subr.bf16.mxu0 0
  %828 = vmatpush2.bf16.msra.mxu0 0
  %829 = vmatprep.subr.bf16.mxu0 0
  %830 = vmatpush2.bf16.msra.mxu0 0
  %831 = vmatprep.subr.bf16.mxu0 0
  %832 = vmatpush2.bf16.msra.mxu0 0
  %833 = vmatprep.subr.bf16.mxu0 0
  %834 = vmatpush2.bf16.msra.mxu0 0
  %835 = vmatprep.subr.bf16.mxu0 0
  %836 = vmatpush2.bf16.msra.mxu0 0
  %837 = vmatprep.subr.bf16.mxu0 0
  %838 = vmatpush2.bf16.msra.mxu0 0
  %839 = vmatprep.subr.bf16.mxu0 0
  %840 = vmatpush2.bf16.msra.mxu0 0
  %841 = vmatprep.subr.bf16.mxu0 0
  %842 = vmatpush2.bf16.msra.mxu0 0
  %843 = vmatprep.mubr.bf16.mxu0 0
  %844 = vmatmul.mubr.bf16.gmra.mxu0 %v809
  %v845 = vpop.f32.mrf.mxu0
  %v846 = vadd.f32 0.0, %v845
  %v847 = vpop.f32.mrf.mxu0
  %v848 = vpop.f32.mrf.mxu0
  %v849 = vpop.f32.mrf.mxu0
  %850 = vdwg.mxu0
  %v851 = vadd.f32 %v806, %v846
  %v852 = vxor.u32 %v851, 2147483648
  %v853 = vmul.f32 %v852, 1.442695
  %v854 = vpow.pop %v853
  %v855 = vadd.f32 %v854, 1.0
  %v856 = vrcp.pop %v855
  %v857 = vmul.f32 1.0, %v856
  %v858 = vtanh.pop %v851
  %860 = vrot.lane.b32.xlu0 %v805, 32
  %v861 = vpop.permute.xlu0 %860
  %v863 = vmul.f32 %v857, %v861
  %865 = vrot.lane.b32.xlu0 %v858, 32
  %v866 = vpop.permute.xlu0 %865
  %v868 = vmul.f32 %v857, %v866
  %870 = vrot.lane.b32.xlu0 %v868, 32
  %v871 = vpop.permute.xlu0 %870
  %v873 = vadd.f32 %v863, %v871
  %v874 = vtanh.pop %v873
  %876 = vrot.lane.b32.xlu0 %v874, 32
  %v877 = vpop.permute.xlu0 %876
  %v879 = vmul.f32 %v857, %v877
  %881 = vrot.lane.b32.xlu0 %v879, 64
  %v882 = vpop.permute.xlu0 %881
  %v884 = vsel %vm538, %v882, %v800
  %886 = vrot.lane.b32.xlu0 %v873, 96
  %v887 = vpop.permute.xlu0 %886
  %v889 = vsel %vm538, %v887, %v805
  %v890 = vld [vmem:[#allocation2 + $0x20] sm:$0xff]
  %v891 = vpack.c.bf16 %v884, %v884
  %v893 = vsel %vm189, %v891, 0
  %895 = vmatprep.subr.bf16.mxu0 0
  %896 = vmatpush1.bf16.msra.mxu0 0
  %897 = vmatprep.subr.bf16.mxu0 0
  %898 = vmatpush1.bf16.msra.mxu0 0
  %899 = vmatprep.subr.bf16.mxu0 0
  %900 = vmatpush1.bf16.msra.mxu0 0
  %901 = vmatprep.subr.bf16.mxu0 0
  %902 = vmatpush1.bf16.msra.mxu0 0
  %903 = vmatprep.subr.bf16.mxu0 0
  %904 = vmatpush1.bf16.msra.mxu0 0
  %905 = vmatprep.subr.bf16.mxu0 0
  %906 = vmatpush1.bf16.msra.mxu0 0
  %907 = vmatprep.subr.bf16.mxu0 0
  %908 = vmatpush1.bf16.msra.mxu0 %v557
  %909 = vmatprep.subr.bf16.mxu0 0
  %910 = vmatpush1.bf16.msra.mxu0 %v556
  %911 = vmatprep.subr.bf16.mxu0 0
  %912 = vmatpush2.bf16.msra.mxu0 0
  %913 = vmatprep.subr.bf16.mxu0 0
  %914 = vmatpush2.bf16.msra.mxu0 0
  %915 = vmatprep.subr.bf16.mxu0 0
  %916 = vmatpush2.bf16.msra.mxu0 0
  %917 = vmatprep.subr.bf16.mxu0 0
  %918 = vmatpush2.bf16.msra.mxu0 0
  %919 = vmatprep.subr.bf16.mxu0 0
  %920 = vmatpush2.bf16.msra.mxu0 0
  %921 = vmatprep.subr.bf16.mxu0 0
  %922 = vmatpush2.bf16.msra.mxu0 0
  %923 = vmatprep.subr.bf16.mxu0 0
  %924 = vmatpush2.bf16.msra.mxu0 0
  %925 = vmatprep.subr.bf16.mxu0 0
  %926 = vmatpush2.bf16.msra.mxu0 0
  %927 = vmatprep.mubr.bf16.mxu0 0
  %928 = vmatmul.mubr.bf16.gmra.mxu0 %v893
  %v929 = vpop.f32.mrf.mxu0
  %v930 = vadd.f32 0.0, %v929
  %v931 = vpop.f32.mrf.mxu0
  %v932 = vpop.f32.mrf.mxu0
  %v933 = vpop.f32.mrf.mxu0
  %934 = vdwg.mxu0
  %v935 = vadd.f32 %v890, %v930
  %v936 = vxor.u32 %v935, 2147483648
  %v937 = vmul.f32 %v936, 1.442695
  %v938 = vpow.pop %v937
  %v939 = vadd.f32 %v938, 1.0
  %v940 = vrcp.pop %v939
  %v941 = vmul.f32 1.0, %v940
  %v942 = vtanh.pop %v935
  %944 = vrot.lane.b32.xlu0 %v889, 32
  %v945 = vpop.permute.xlu0 %944
  %v947 = vmul.f32 %v941, %v945
  %949 = vrot.lane.b32.xlu0 %v942, 32
  %v950 = vpop.permute.xlu0 %949
  %v952 = vmul.f32 %v941, %v950
  %954 = vrot.lane.b32.xlu0 %v952, 32
  %v955 = vpop.permute.xlu0 %954
  %v957 = vadd.f32 %v947, %v955
  %v958 = vtanh.pop %v957
  %960 = vrot.lane.b32.xlu0 %v958, 32
  %v961 = vpop.permute.xlu0 %960
  %v963 = vmul.f32 %v941, %v961
  %965 = vrot.lane.b32.xlu0 %v963, 64
  %v966 = vpop.permute.xlu0 %965
  %v968 = vsel %vm540, %v966, %v884
  %970 = vrot.lane.b32.xlu0 %v957, 96
  %v971 = vpop.permute.xlu0 %970
  %v973 = vsel %vm540, %v971, %v889
  %v974 = vld [vmem:[#allocation2 + $0x28] sm:$0xff]
  %v975 = vpack.c.bf16 %v968, %v968
  %v977 = vsel %vm189, %v975, 0
  %979 = vmatprep.subr.bf16.mxu0 0
  %980 = vmatpush1.bf16.msra.mxu0 0
  %981 = vmatprep.subr.bf16.mxu0 0
  %982 = vmatpush1.bf16.msra.mxu0 0
  %983 = vmatprep.subr.bf16.mxu0 0
  %984 = vmatpush1.bf16.msra.mxu0 0
  %985 = vmatprep.subr.bf16.mxu0 0
  %986 = vmatpush1.bf16.msra.mxu0 0
  %987 = vmatprep.subr.bf16.mxu0 0
  %988 = vmatpush1.bf16.msra.mxu0 0
  %989 = vmatprep.subr.bf16.mxu0 0
  %990 = vmatpush1.bf16.msra.mxu0 0
  %991 = vmatprep.subr.bf16.mxu0 0
  %992 = vmatpush1.bf16.msra.mxu0 %v557
  %993 = vmatprep.subr.bf16.mxu0 0
  %994 = vmatpush1.bf16.msra.mxu0 %v556
  %995 = vmatprep.subr.bf16.mxu0 0
  %996 = vmatpush2.bf16.msra.mxu0 0
  %997 = vmatprep.subr.bf16.mxu0 0
  %998 = vmatpush2.bf16.msra.mxu0 0
  %999 = vmatprep.subr.bf16.mxu0 0
  %1000 = vmatpush2.bf16.msra.mxu0 0
  %1001 = vmatprep.subr.bf16.mxu0 0
  %1002 = vmatpush2.bf16.msra.mxu0 0
  %1003 = vmatprep.subr.bf16.mxu0 0
  %1004 = vmatpush2.bf16.msra.mxu0 0
  %1005 = vmatprep.subr.bf16.mxu0 0
  %1006 = vmatpush2.bf16.msra.mxu0 0
  %1007 = vmatprep.subr.bf16.mxu0 0
  %1008 = vmatpush2.bf16.msra.mxu0 0
  %1009 = vmatprep.subr.bf16.mxu0 0
  %1010 = vmatpush2.bf16.msra.mxu0 0
  %1011 = vmatprep.mubr.bf16.mxu0 0
  %1012 = vmatmul.mubr.bf16.gmra.mxu0 %v977
  %v1013 = vpop.f32.mrf.mxu0
  %v1014 = vadd.f32 0.0, %v1013
  %v1015 = vpop.f32.mrf.mxu0
  %v1016 = vpop.f32.mrf.mxu0
  %v1017 = vpop.f32.mrf.mxu0
  %1018 = vdwg.mxu0
  %v1019 = vadd.f32 %v974, %v1014
  %v1020 = vxor.u32 %v1019, 2147483648
  %v1021 = vmul.f32 %v1020, 1.442695
  %v1022 = vpow.pop %v1021
  %v1023 = vadd.f32 %v1022, 1.0
  %v1024 = vrcp.pop %v1023
  %v1025 = vmul.f32 1.0, %v1024
  %v1026 = vtanh.pop %v1019
  %1028 = vrot.lane.b32.xlu0 %v973, 32
  %v1029 = vpop.permute.xlu0 %1028
  %v1031 = vmul.f32 %v1025, %v1029
  %1033 = vrot.lane.b32.xlu0 %v1026, 32
  %v1034 = vpop.permute.xlu0 %1033
  %v1036 = vmul.f32 %v1025, %v1034
  %1038 = vrot.lane.b32.xlu0 %v1036, 32
  %v1039 = vpop.permute.xlu0 %1038
  %v1041 = vadd.f32 %v1031, %v1039
  %v1042 = vtanh.pop %v1041
  %1044 = vrot.lane.b32.xlu0 %v1042, 32
  %v1045 = vpop.permute.xlu0 %1044
  %v1047 = vmul.f32 %v1025, %v1045
  %1049 = vrot.lane.b32.xlu0 %v1047, 64
  %v1050 = vpop.permute.xlu0 %1049
  %v1052 = vsel %vm542, %v1050, %v968
  %1054 = vrot.lane.b32.xlu0 %v1041, 96
  %v1055 = vpop.permute.xlu0 %1054
  %v1057 = vsel %vm542, %v1055, %v973
  %v1058 = vld [vmem:[#allocation2 + $0x30] sm:$0xff]
  %v1059 = vpack.c.bf16 %v1052, %v1052
  %v1061 = vsel %vm189, %v1059, 0
  %1063 = vmatprep.subr.bf16.mxu0 0
  %1064 = vmatpush1.bf16.msra.mxu0 0
  %1065 = vmatprep.subr.bf16.mxu0 0
  %1066 = vmatpush1.bf16.msra.mxu0 0
  %1067 = vmatprep.subr.bf16.mxu0 0
  %1068 = vmatpush1.bf16.msra.mxu0 0
  %1069 = vmatprep.subr.bf16.mxu0 0
  %1070 = vmatpush1.bf16.msra.mxu0 0
  %1071 = vmatprep.subr.bf16.mxu0 0
  %1072 = vmatpush1.bf16.msra.mxu0 0
  %1073 = vmatprep.subr.bf16.mxu0 0
  %1074 = vmatpush1.bf16.msra.mxu0 0
  %1075 = vmatprep.subr.bf16.mxu0 0
  %1076 = vmatpush1.bf16.msra.mxu0 %v557
  %1077 = vmatprep.subr.bf16.mxu0 0
  %1078 = vmatpush1.bf16.msra.mxu0 %v556
  %1079 = vmatprep.subr.bf16.mxu0 0
  %1080 = vmatpush2.bf16.msra.mxu0 0
  %1081 = vmatprep.subr.bf16.mxu0 0
  %1082 = vmatpush2.bf16.msra.mxu0 0
  %1083 = vmatprep.subr.bf16.mxu0 0
  %1084 = vmatpush2.bf16.msra.mxu0 0
  %1085 = vmatprep.subr.bf16.mxu0 0
  %1086 = vmatpush2.bf16.msra.mxu0 0
  %1087 = vmatprep.subr.bf16.mxu0 0
  %1088 = vmatpush2.bf16.msra.mxu0 0
  %1089 = vmatprep.subr.bf16.mxu0 0
  %1090 = vmatpush2.bf16.msra.mxu0 0
  %1091 = vmatprep.subr.bf16.mxu0 0
  %1092 = vmatpush2.bf16.msra.mxu0 0
  %1093 = vmatprep.subr.bf16.mxu0 0
  %1094 = vmatpush2.bf16.msra.mxu0 0
  %1095 = vmatprep.mubr.bf16.mxu0 0
  %1096 = vmatmul.mubr.bf16.gmra.mxu0 %v1061
  %v1097 = vpop.f32.mrf.mxu0
  %v1098 = vadd.f32 0.0, %v1097
  %v1099 = vpop.f32.mrf.mxu0
  %v1100 = vpop.f32.mrf.mxu0
  %v1101 = vpop.f32.mrf.mxu0
  %1102 = vdwg.mxu0
  %v1103 = vadd.f32 %v1058, %v1098
  %v1104 = vxor.u32 %v1103, 2147483648
  %v1105 = vmul.f32 %v1104, 1.442695
  %v1106 = vpow.pop %v1105
  %v1107 = vadd.f32 %v1106, 1.0
  %v1108 = vrcp.pop %v1107
  %v1109 = vmul.f32 1.0, %v1108
  %v1110 = vtanh.pop %v1103
  %1112 = vrot.lane.b32.xlu0 %v1057, 32
  %v1113 = vpop.permute.xlu0 %1112
  %v1115 = vmul.f32 %v1109, %v1113
  %1117 = vrot.lane.b32.xlu0 %v1110, 32
  %v1118 = vpop.permute.xlu0 %1117
  %v1120 = vmul.f32 %v1109, %v1118
  %1122 = vrot.lane.b32.xlu0 %v1120, 32
  %v1123 = vpop.permute.xlu0 %1122
  %v1125 = vadd.f32 %v1115, %v1123
  %v1126 = vtanh.pop %v1125
  %1128 = vrot.lane.b32.xlu0 %v1126, 32
  %v1129 = vpop.permute.xlu0 %1128
  %v1131 = vmul.f32 %v1109, %v1129
  %1133 = vrot.lane.b32.xlu0 %v1131, 64
  %v1134 = vpop.permute.xlu0 %1133
  %v1136 = vsel %vm544, %v1134, %v1052
  %1138 = vrot.lane.b32.xlu0 %v1125, 96
  %v1139 = vpop.permute.xlu0 %1138
  %v1141 = vsel %vm544, %v1139, %v1057
  %v1142 = vld [vmem:[#allocation2 + $0x38] sm:$0xff]
  %v1143 = vpack.c.bf16 %v1136, %v1136
  %v1145 = vsel %vm189, %v1143, 0
  %1147 = vmatprep.subr.bf16.mxu0 0
  %1148 = vmatpush1.bf16.msra.mxu0 0
  %1149 = vmatprep.subr.bf16.mxu0 0
  %1150 = vmatpush1.bf16.msra.mxu0 0
  %1151 = vmatprep.subr.bf16.mxu0 0
  %1152 = vmatpush1.bf16.msra.mxu0 0
  %1153 = vmatprep.subr.bf16.mxu0 0
  %1154 = vmatpush1.bf16.msra.mxu0 0
  %1155 = vmatprep.subr.bf16.mxu0 0
  %1156 = vmatpush1.bf16.msra.mxu0 0
  %1157 = vmatprep.subr.bf16.mxu0 0
  %1158 = vmatpush1.bf16.msra.mxu0 0
  %1159 = vmatprep.subr.bf16.mxu0 0
  %1160 = vmatpush1.bf16.msra.mxu0 %v557
  %1161 = vmatprep.subr.bf16.mxu0 0
  %1162 = vmatpush1.bf16.msra.mxu0 %v556
  %1163 = vmatprep.subr.bf16.mxu0 0
  %1164 = vmatpush2.bf16.msra.mxu0 0
  %1165 = vmatprep.subr.bf16.mxu0 0
  %1166 = vmatpush2.bf16.msra.mxu0 0
  %1167 = vmatprep.subr.bf16.mxu0 0
  %1168 = vmatpush2.bf16.msra.mxu0 0
  %1169 = vmatprep.subr.bf16.mxu0 0
  %1170 = vmatpush2.bf16.msra.mxu0 0
  %1171 = vmatprep.subr.bf16.mxu0 0
  %1172 = vmatpush2.bf16.msra.mxu0 0
  %1173 = vmatprep.subr.bf16.mxu0 0
  %1174 = vmatpush2.bf16.msra.mxu0 0
  %1175 = vmatprep.subr.bf16.mxu0 0
  %1176 = vmatpush2.bf16.msra.mxu0 0
  %1177 = vmatprep.subr.bf16.mxu0 0
  %1178 = vmatpush2.bf16.msra.mxu0 0
  %1179 = vmatprep.mubr.bf16.mxu0 0
  %1180 = vmatmul.mubr.bf16.gmra.mxu0 %v1145
  %v1181 = vpop.f32.mrf.mxu0
  %v1182 = vadd.f32 0.0, %v1181
  %v1183 = vpop.f32.mrf.mxu0
  %v1184 = vpop.f32.mrf.mxu0
  %v1185 = vpop.f32.mrf.mxu0
  %1186 = vdwg.mxu0
  %v1187 = vadd.f32 %v1142, %v1182
  %v1188 = vxor.u32 %v1187, 2147483648
  %v1189 = vmul.f32 %v1188, 1.442695
  %v1190 = vpow.pop %v1189
  %v1191 = vadd.f32 %v1190, 1.0
  %v1192 = vrcp.pop %v1191
  %v1193 = vmul.f32 1.0, %v1192
  %v1194 = vtanh.pop %v1187
  %1196 = vrot.lane.b32.xlu0 %v1141, 32
  %v1197 = vpop.permute.xlu0 %1196
  %v1199 = vmul.f32 %v1193, %v1197
  %1201 = vrot.lane.b32.xlu0 %v1194, 32
  %v1202 = vpop.permute.xlu0 %1201
  %v1204 = vmul.f32 %v1193, %v1202
  %1206 = vrot.lane.b32.xlu0 %v1204, 32
  %v1207 = vpop.permute.xlu0 %1206
  %v1209 = vadd.f32 %v1199, %v1207
  %v1210 = vtanh.pop %v1209
  %1212 = vrot.lane.b32.xlu0 %v1210, 32
  %v1213 = vpop.permute.xlu0 %1212
  %v1215 = vmul.f32 %v1193, %v1213
  %1217 = vrot.lane.b32.xlu0 %v1215, 64
  %v1218 = vpop.permute.xlu0 %1217
  %v1220 = vsel %vm546, %v1218, %v1136
  %v1221 = vmax.f32 %v1220, -1.0
  %v1222 = vmin.f32 %v1221, 1.0
  %v1223 = vmax.f32 %v316, -1.0
  %v1224 = vmin.f32 %v1223, 1.0
  %v1225 = vpack.c.bf16 %v1224, %v1224
  %v1226 = vlaneseq
  %v1227 = vshrl.u32 %v1226, 7
  %v1228 = vsub.s32 0, %v1227
  %v1229 = vrot.slane %v35, %v1228
  %v1234 = vunpack.c.l.b16 %v30
  %v1235 = vunpack.c.l.b16 %v31
  %v1236 = vunpack.c.l.b16 %v32
  %v1237 = vunpack.c.l.b16 %v33
  %v1238 = vpack.c.b16 %v1235, %v1234
  %v1239 = vpack.c.b16 %v1237, %v1236
  %v1243 = vsel %vm189, %v1225, 0
  %1245 = vmatprep.subr.bf16.mxu0 0
  %1246 = vmatpush1.bf16.msra.mxu0 0
  %1247 = vmatprep.subr.bf16.mxu0 0
  %1248 = vmatpush1.bf16.msra.mxu0 0
  %1249 = vmatprep.subr.bf16.mxu0 0
  %1250 = vmatpush1.bf16.msra.mxu0 0
  %1251 = vmatprep.subr.bf16.mxu0 0
  %1252 = vmatpush1.bf16.msra.mxu0 0
  %1253 = vmatprep.subr.bf16.mxu0 0
  %1254 = vmatpush1.bf16.msra.mxu0 0
  %1255 = vmatprep.subr.bf16.mxu0 0
  %1256 = vmatpush1.bf16.msra.mxu0 0
  %1257 = vmatprep.subr.bf16.mxu0 0
  %1258 = vmatpush1.bf16.msra.mxu0 %v1239
  %1259 = vmatprep.subr.bf16.mxu0 0
  %1260 = vmatpush1.bf16.msra.mxu0 %v1238
  %1261 = vmatprep.subr.bf16.mxu0 0
  %1262 = vmatpush2.bf16.msra.mxu0 0
  %1263 = vmatprep.subr.bf16.mxu0 0
  %1264 = vmatpush2.bf16.msra.mxu0 0
  %1265 = vmatprep.subr.bf16.mxu0 0
  %1266 = vmatpush2.bf16.msra.mxu0 0
  %1267 = vmatprep.subr.bf16.mxu0 0
  %1268 = vmatpush2.bf16.msra.mxu0 0
  %1269 = vmatprep.subr.bf16.mxu0 0
  %1270 = vmatpush2.bf16.msra.mxu0 0
  %1271 = vmatprep.subr.bf16.mxu0 0
  %1272 = vmatpush2.bf16.msra.mxu0 0
  %1273 = vmatprep.subr.bf16.mxu0 0
  %1274 = vmatpush2.bf16.msra.mxu0 0
  %1275 = vmatprep.subr.bf16.mxu0 0
  %1276 = vmatpush2.bf16.msra.mxu0 0
  %1277 = vmatprep.mubr.bf16.mxu0 0
  %1278 = vmatmul.mubr.bf16.gmra.mxu0 %v1243
  %v1279 = vpop.f32.mrf.mxu0
  %v1280 = vadd.f32 %v1229, %v1279
  %v1281 = vpop.f32.mrf.mxu0
  %v1282 = vpop.f32.mrf.mxu0
  %v1283 = vpop.f32.mrf.mxu0
  %1284 = vdwg.mxu0
  %v1285 = vmax.f32 %v1280, -1.0
  %v1286 = vmin.f32 %v1285, 1.0
  %1288 = vrot.lane.b32.xlu0 %v1286, 32
  %v1289 = vpop.permute.xlu0 %1288
  %v1291 = vsel %vm189, %v1222, %v1289
  %v1292 = vpack.c.bf16 %v1291, %v1291
  %v1293 = vlaneseq
  %v1294 = vshrl.u32 %v1293, 7
  %v1295 = vsub.s32 0, %v1294
  %v1296 = vrot.slane %v45, %v1295
  %v1305 = vunpack.c.l.b16 %v36
  %v1306 = vunpack.c.l.b16 %v37
  %v1307 = vunpack.c.l.b16 %v38
  %v1308 = vunpack.c.l.b16 %v39
  %v1309 = vunpack.c.l.b16 %v40
  %v1310 = vunpack.c.l.b16 %v41
  %v1311 = vunpack.c.l.b16 %v42
  %v1312 = vunpack.c.l.b16 %v43
  %v1313 = vpack.c.b16 %v1306, %v1305
  %v1314 = vpack.c.b16 %v1308, %v1307
  %v1315 = vpack.c.b16 %v1310, %v1309
  %v1316 = vpack.c.b16 %v1312, %v1311
  %vm1321 = vcmask 523264
  %v1323 = vsel %vm1321, %v1292, 0
  %1325 = vmatprep.subr.bf16.mxu0 0
  %1326 = vmatpush1.bf16.msra.mxu0 0
  %1327 = vmatprep.subr.bf16.mxu0 0
  %1328 = vmatpush1.bf16.msra.mxu0 0
  %1329 = vmatprep.subr.bf16.mxu0 0
  %1330 = vmatpush1.bf16.msra.mxu0 0
  %1331 = vmatprep.subr.bf16.mxu0 0
  %1332 = vmatpush1.bf16.msra.mxu0 0
  %1333 = vmatprep.subr.bf16.mxu0 0
  %1334 = vmatpush1.bf16.msra.mxu0 %v1316
  %1335 = vmatprep.subr.bf16.mxu0 0
  %1336 = vmatpush1.bf16.msra.mxu0 %v1315
  %1337 = vmatprep.subr.bf16.mxu0 0
  %1338 = vmatpush1.bf16.msra.mxu0 %v1314
  %1339 = vmatprep.subr.bf16.mxu0 0
  %1340 = vmatpush1.bf16.msra.mxu0 %v1313
  %1341 = vmatprep.subr.bf16.mxu0 0
  %1342 = vmatpush2.bf16.msra.mxu0 0
  %1343 = vmatprep.subr.bf16.mxu0 0
  %1344 = vmatpush2.bf16.msra.mxu0 0
  %1345 = vmatprep.subr.bf16.mxu0 0
  %1346 = vmatpush2.bf16.msra.mxu0 0
  %1347 = vmatprep.subr.bf16.mxu0 0
  %1348 = vmatpush2.bf16.msra.mxu0 0
  %1349 = vmatprep.subr.bf16.mxu0 0
  %1350 = vmatpush2.bf16.msra.mxu0 0
  %1351 = vmatprep.subr.bf16.mxu0 0
  %1352 = vmatpush2.bf16.msra.mxu0 0
  %1353 = vmatprep.subr.bf16.mxu0 0
  %1354 = vmatpush2.bf16.msra.mxu0 0
  %1355 = vmatprep.subr.bf16.mxu0 0
  %1356 = vmatpush2.bf16.msra.mxu0 0
  %1357 = vmatprep.mubr.bf16.mxu0 0
  %1358 = vmatmul.mubr.bf16.gmra.mxu0 %v1323
  %v1359 = vpop.f32.mrf.mxu0
  %v1360 = vadd.f32 %v1296, %v1359
  %v1361 = vpop.f32.mrf.mxu0
  %v1362 = vpop.f32.mrf.mxu0
  %v1363 = vpop.f32.mrf.mxu0
  %1364 = vdwg.mxu0
  %1365 = vst [vmem:[%s2] sm:$0xff] %v1360
  // Predicated region
  $region10: #{forward.1} parent=0 // pred_check
    _
  $region11: #{forward.1} parent=0 // pred_check_branch
    %1367 = sbr.rel (0) target = $region13
  $region12: #{forward.1} parent=0 // pred_region
    _
  $region13: #{forward.1} parent=0 // pred_fallthru
    _
  // Predicated region
  $region14: #{forward.1} parent=0 // pred_check
    _
  $region15: #{forward.1} parent=0 // pred_check_branch
    %1369 = sbr.rel (0) target = $region17
  $region16: #{forward.1} parent=0 // pred_region
    _
  $region17: #{forward.1} parent=0 // pred_fallthru
    _

</llo_original>
